<compile_context>
chip_gen: v7x
topology: tpu7x:2x2x1
jax: 0.10.0
libtpu: 0.0.40
codegen_flags: <defaults>
</compile_context>

<pallas_src>
import functools
import math

import jax
import jax.numpy as jnp
from jax import lax
from jax.experimental import pallas as pl
from jax.experimental.pallas import tpu as pltpu

EPS = 1e-6


def encoder_block_kernel(x_ref, bias_ref,
                         ln1_a_ref, ln1_b_ref,
                         wq_ref, bq_ref, wk_ref, bk_ref,
                         wv_ref, bv_ref, wo_ref, bo_ref,
                         ln2_a_ref, ln2_b_ref,
                         w1_ref, b1_ref, w2_ref, b2_ref,
                         o_ref, *, num_heads, q_block):
    S = x_ref.shape[1]
    D = x_ref.shape[2]
    H = num_heads
    dk = D // H
    TQ = q_block
    bf16 = jnp.bfloat16

    q_start = pl.multiple_of(pl.program_id(1) * TQ, TQ)

    x_full = x_ref[0]                               # (S, D)   f32
    x_q = x_ref[0, pl.ds(q_start, TQ), :]           # (TQ, D)  f32
    bias = bias_ref[0, 0].astype(jnp.float32)       # (TQ, S)  additive mask

    def layer_norm(v, a_ref, b_ref):
        # f32 statistics; torch.std is unbiased (ddof=1); eps added to std.
        mean = jnp.mean(v, axis=-1, keepdims=True)
        var = jnp.sum((v - mean) ** 2, axis=-1, keepdims=True) * (1.0 / (D - 1))
        inv = pl.reciprocal(jnp.sqrt(var) + EPS, approx=True)   # EUP, not VPU
        return a_ref[0] * (v - mean) * inv + b_ref[0]

    # ---- residual connection 1: x + MHA(LN(x))  (dropout = identity) ----
    xn_kv = layer_norm(x_full, ln1_a_ref, ln1_b_ref).astype(bf16)   # (S, D)
    xn_q = layer_norm(x_q, ln1_a_ref, ln1_b_ref).astype(bf16)       # (TQ, D)

    # bf16 MXU matmuls, f32 accumulation.
    q = (jnp.dot(xn_q, wq_ref[...], preferred_element_type=jnp.float32)
         + bq_ref[0]).astype(bf16)                                  # (TQ, D)
    k = (jnp.dot(xn_kv, wk_ref[...], preferred_element_type=jnp.float32)
         + bk_ref[0]).astype(bf16)                                  # (S, D)
    v = (jnp.dot(xn_kv, wv_ref[...], preferred_element_type=jnp.float32)
         + bv_ref[0]).astype(bf16)                                  # (S, D)

    inv_sqrt_dk = 1.0 / math.sqrt(dk)
    attn_acc = jnp.zeros((TQ, D), jnp.float32)
    for h in range(H):                                  # static loop over heads
        lo = h * dk
        qh = q[:, lo:lo + dk]                           # (TQ, dk)
        kh = k[:, lo:lo + dk]                           # (S, dk)
        vh = v[:, lo:lo + dk]                           # (S, dk)
        # scores = qh @ kh^T / sqrt(dk) + additive mask bias (select hoisted).
        scores = lax.dot_general(qh, kh, (((1,), (1,)), ((), ())),
                                 preferred_element_type=jnp.float32)
        scores = scores * inv_sqrt_dk + bias
        # softmax over keys (f32 numerics, EUP reciprocal).
        scores = scores - jnp.max(scores, axis=-1, keepdims=True)
        p = jnp.exp(scores)
        p = p * pl.reciprocal(jnp.sum(p, axis=-1, keepdims=True), approx=True)
        ctx = jnp.dot(p.astype(bf16), vh,
                      preferred_element_type=jnp.float32)           # (TQ, dk)
        # Fold the Wo row-slice into the head loop: no lane concat of heads.
        attn_acc = attn_acc + jnp.dot(ctx.astype(bf16), wo_ref[h],
                                      preferred_element_type=jnp.float32)
    x1 = x_q + attn_acc + bo_ref[0]                                  # (TQ, D)

    # ---- residual connection 2: x1 + FFN(LN(x1)) ----
    x1n = layer_norm(x1, ln2_a_ref, ln2_b_ref).astype(bf16)
    hdn = jnp.dot(x1n, w1_ref[...], preferred_element_type=jnp.float32) + b1_ref[0]
    hdn = jnp.maximum(hdn, 0.0).astype(bf16)
    ffn = jnp.dot(hdn, w2_ref[...], preferred_element_type=jnp.float32) + b2_ref[0]
    o_ref[0] = (x1 + ffn).astype(o_ref.dtype)


def _pick_q_block(S):
    if S <= 256:
        return S
    for t in (256, 128, 64, 32, 16, 8):
        if S % t == 0:
            return t
    return S


def encoder_block(x, mask, params, num_heads, q_block=None):
    B, S, D = x.shape
    Dff = params["w1"].shape[1]
    H = num_heads
    dk = D // H
    if q_block is None:
        q_block = _pick_q_block(S)
    assert S % q_block == 0
    n_q = S // q_block

    bf16 = jnp.bfloat16
    wq = params["wq"].astype(bf16)
    wk = params["wk"].astype(bf16)
    wv = params["wv"].astype(bf16)
    wo3 = params["wo"].reshape(H, dk, D).astype(bf16)   # per-head Wo slices
    w1 = params["w1"].astype(bf16)
    w2 = params["w2"].astype(bf16)
    # Additive attention bias: 0 where attend, -1e9 where masked (bf16 => 2x
    # less DMA than the f32 mask; select happens once in the wrapper).
    mask_bias = jnp.where(mask == 0, jnp.float32(-1e9),
                          jnp.float32(0.0)).astype(bf16)

    def full_spec(shape):
        n = len(shape)
        return pl.BlockSpec(shape, lambda b, q, _n=n: (0,) * _n)

    in_specs = [
        pl.BlockSpec((1, S, D), lambda b, q: (b, 0, 0)),              # x (full seq)
        pl.BlockSpec((1, 1, q_block, S), lambda b, q: (b, 0, q, 0)),  # mask bias
        full_spec((1, D)), full_spec((1, D)),                         # ln1 a, b
        full_spec((D, D)), full_spec((1, D)),                         # Wq, bq
        full_spec((D, D)), full_spec((1, D)),                         # Wk, bk
        full_spec((D, D)), full_spec((1, D)),                         # Wv, bv
        full_spec((H, dk, D)), full_spec((1, D)),                     # Wo (per head), bo
        full_spec((1, D)), full_spec((1, D)),                         # ln2 a, b
        full_spec((D, Dff)), full_spec((1, Dff)),                     # W1, b1
        full_spec((Dff, D)), full_spec((1, D)),                       # W2, b2
    ]

    # Advisory cost estimate (helps XLA schedule/overlap around the kernel).
    flops = B * (8 * S * D * D + 4 * S * S * D + 4 * S * D * Dff)
    transcendentals = B * (H * S * S + 4 * S)
    bytes_accessed = (2 * B * S * D * 4                 # x in + out (f32)
                      + B * S * S * 2                   # mask bias (bf16)
                      + 2 * (4 * D * D + 2 * D * Dff)   # bf16 weights
                      + 4 * (6 * D + Dff))              # f32 biases / LN params
    cost = pl.CostEstimate(flops=int(flops),
                           transcendentals=int(transcendentals),
                           bytes_accessed=int(bytes_accessed))

    # Explicit VMEM budget (weights resident + streamed blocks + headroom),
    # kept <= 64 MiB so it is also valid on v7x's smaller physical VMEM.
    weight_vmem = 2 * (4 * D * D + 2 * D * Dff) + 4 * (6 * D + Dff)
    stream_vmem = 4 * S * D + 2 * q_block * S + 4 * q_block * D
    vmem_limit = int(min(64 * 1024 * 1024,
                         max(32 * 1024 * 1024, 6 * (weight_vmem + stream_vmem))))

    kernel = functools.partial(encoder_block_kernel,
                               num_heads=H, q_block=q_block)

    return pl.pallas_call(
        kernel,
        out_shape=jax.ShapeDtypeStruct((B, S, D), jnp.float32),
        grid_spec=pltpu.PrefetchScalarGridSpec(
            num_scalar_prefetch=0,
            grid=(B, n_q),
            in_specs=in_specs,
            out_specs=pl.BlockSpec((1, q_block, D), lambda b, q: (b, q, 0)),
        ),
        compiler_params=pltpu.CompilerParams(
            dimension_semantics=("parallel", "parallel"),
            vmem_limit_bytes=vmem_limit),
        cost_estimate=cost,
    )(x, mask_bias,
      params["ln1_a"], params["ln1_b"],
      wq, params["bq"], wk, params["bk"],
      wv, params["bv"], wo3, params["bo"],
      params["ln2_a"], params["ln2_b"],
      w1, params["b1"], w2, params["b2"])


def encoder_block_reference(x, mask, params, num_heads):
    """Pure-JAX f32 reference of the same forward pass (for verification)."""
    B, S, D = x.shape
    H = num_heads
    dk = D // H

    def layer_norm(v, a, b):
        mean = jnp.mean(v, axis=-1, keepdims=True)
        var = jnp.sum((v - mean) ** 2, axis=-1, keepdims=True) / (D - 1)
        return a[0] * (v - mean) / (jnp.sqrt(var) + EPS) + b[0]

    xn = layer_norm(x, params["ln1_a"], params["ln1_b"])
    q = xn @ params["wq"] + params["bq"][0]
    k = xn @ params["wk"] + params["bk"][0]
    v = xn @ params["wv"] + params["bv"][0]
    q = q.reshape(B, S, H, dk).transpose(0, 2, 1, 3)
    k = k.reshape(B, S, H, dk).transpose(0, 2, 1, 3)
    v = v.reshape(B, S, H, dk).transpose(0, 2, 1, 3)
    scores = jnp.einsum("bhqd,bhkd->bhqk", q, k) / math.sqrt(dk)
    scores = jnp.where(mask[:, :, :, :] == 0, -1e9, scores)
    p = jax.nn.softmax(scores, axis=-1)
    ctx = jnp.einsum("bhqk,bhkd->bhqd", p, v).transpose(0, 2, 1, 3).reshape(B, S, D)
    x1 = x + (ctx @ params["wo"] + params["bo"][0])

    x1n = layer_norm(x1, params["ln2_a"], params["ln2_b"])
    hdn = jnp.maximum(x1n @ params["w1"] + params["b1"][0], 0.0)
    return x1 + (hdn @ params["w2"] + params["b2"][0])


def init_params(key, D, Dff):
    keys = jax.random.split(key, 12)
    s = 0.02
    return {
        "ln1_a": jnp.ones((1, D), jnp.float32),
        "ln1_b": jnp.zeros((1, D), jnp.float32),
        "wq": s * jax.random.normal(keys[0], (D, D), jnp.float32),
        "bq": s * jax.random.normal(keys[1], (1, D), jnp.float32),
        "wk": s * jax.random.normal(keys[2], (D, D), jnp.float32),
        "bk": s * jax.random.normal(keys[3], (1, D), jnp.float32),
        "wv": s * jax.random.normal(keys[4], (D, D), jnp.float32),
        "bv": s * jax.random.normal(keys[5], (1, D), jnp.float32),
        "wo": s * jax.random.normal(keys[6], (D, D), jnp.float32),
        "bo": s * jax.random.normal(keys[7], (1, D), jnp.float32),
        "ln2_a": jnp.ones((1, D), jnp.float32),
        "ln2_b": jnp.zeros((1, D), jnp.float32),
        "w1": s * jax.random.normal(keys[8], (D, Dff), jnp.float32),
        "b1": s * jax.random.normal(keys[9], (1, Dff), jnp.float32),
        "w2": s * jax.random.normal(keys[10], (Dff, D), jnp.float32),
        "b2": s * jax.random.normal(keys[11], (1, D), jnp.float32),
    }


if __name__ == "__main__":
    B, S, D, H, Dff = 2, 8, 32, 4, 64

    key = jax.random.PRNGKey(0)
    k_x, k_p = jax.random.split(key)
    x = jax.random.normal(k_x, (B, S, D), jnp.float32)

    # mask: batch 0 attends everywhere; batch 1 masks out the last 2 keys.
    mask = jnp.ones((B, 1, S, S), jnp.float32)
    mask = mask.at[1, :, :, S - 2:].set(0.0)

    params = init_params(k_p, D, Dff)

    out = encoder_block(x, mask, params, num_heads=H)
    out = jax.block_until_ready(out)

    ref = encoder_block_reference(x, mask, params, num_heads=H)
    assert out.shape == (B, S, D)
    # bf16 matmuls + approx reciprocals -> slightly looser tolerance than f32.
    assert jnp.allclose(out, ref, atol=2e-3, rtol=2e-3), "mismatch vs reference"

    print("KERNEL_OK")
</pallas_src>

<mosaic_0001>
module attributes {stable_mosaic.version = 11 : i64} {
  func.func @encoder_block_kernel(%arg0: i32, %arg1: i32, %arg2: memref<1x8x32xf32, #tpu.memory_space<vmem>>, %arg3: memref<1x1x8x8xbf16, #tpu.memory_space<vmem>>, %arg4: memref<1x32xf32, #tpu.memory_space<vmem>>, %arg5: memref<1x32xf32, #tpu.memory_space<vmem>>, %arg6: memref<32x32xbf16, #tpu.memory_space<vmem>>, %arg7: memref<1x32xf32, #tpu.memory_space<vmem>>, %arg8: memref<32x32xbf16, #tpu.memory_space<vmem>>, %arg9: memref<1x32xf32, #tpu.memory_space<vmem>>, %arg10: memref<32x32xbf16, #tpu.memory_space<vmem>>, %arg11: memref<1x32xf32, #tpu.memory_space<vmem>>, %arg12: memref<4x8x32xbf16, #tpu.memory_space<vmem>>, %arg13: memref<1x32xf32, #tpu.memory_space<vmem>>, %arg14: memref<1x32xf32, #tpu.memory_space<vmem>>, %arg15: memref<1x32xf32, #tpu.memory_space<vmem>>, %arg16: memref<32x64xbf16, #tpu.memory_space<vmem>>, %arg17: memref<1x64xf32, #tpu.memory_space<vmem>>, %arg18: memref<64x32xbf16, #tpu.memory_space<vmem>>, %arg19: memref<1x32xf32, #tpu.memory_space<vmem>>, %arg20: memref<1x8x32xf32, #tpu.memory_space<vmem>>) attributes {dimension_semantics = [#tpu.dimension_semantics<parallel>, #tpu.dimension_semantics<parallel>], iteration_bounds = array<i64: 2, 1>, scalar_prefetch = 0 : i64, scratch_operands = 0 : i64, tpu.core_type = #tpu.core_type<tc>, window_params = [{transform_indices = @transform_0, window_bounds = array<i64: 1, 8, 32>}, {transform_indices = @transform_1, window_bounds = array<i64: 1, 1, 8, 8>}, {pipeline_mode = #tpu.pipeline_mode<synchronous>, transform_indices = @transform_2, window_bounds = array<i64: 1, 32>}, {pipeline_mode = #tpu.pipeline_mode<synchronous>, transform_indices = @transform_3, window_bounds = array<i64: 1, 32>}, {pipeline_mode = #tpu.pipeline_mode<synchronous>, transform_indices = @transform_4, window_bounds = array<i64: 32, 32>}, {pipeline_mode = #tpu.pipeline_mode<synchronous>, transform_indices = @transform_5, window_bounds = array<i64: 1, 32>}, {pipeline_mode = #tpu.pipeline_mode<synchronous>, transform_indices = @transform_6, window_bounds = array<i64: 32, 32>}, {pipeline_mode = #tpu.pipeline_mode<synchronous>, transform_indices = @transform_7, window_bounds = array<i64: 1, 32>}, {pipeline_mode = #tpu.pipeline_mode<synchronous>, transform_indices = @transform_8, window_bounds = array<i64: 32, 32>}, {pipeline_mode = #tpu.pipeline_mode<synchronous>, transform_indices = @transform_9, window_bounds = array<i64: 1, 32>}, {pipeline_mode = #tpu.pipeline_mode<synchronous>, transform_indices = @transform_10, window_bounds = array<i64: 4, 8, 32>}, {pipeline_mode = #tpu.pipeline_mode<synchronous>, transform_indices = @transform_11, window_bounds = array<i64: 1, 32>}, {pipeline_mode = #tpu.pipeline_mode<synchronous>, transform_indices = @transform_12, window_bounds = array<i64: 1, 32>}, {pipeline_mode = #tpu.pipeline_mode<synchronous>, transform_indices = @transform_13, window_bounds = array<i64: 1, 32>}, {pipeline_mode = #tpu.pipeline_mode<synchronous>, transform_indices = @transform_14, window_bounds = array<i64: 32, 64>}, {pipeline_mode = #tpu.pipeline_mode<synchronous>, transform_indices = @transform_15, window_bounds = array<i64: 1, 64>}, {pipeline_mode = #tpu.pipeline_mode<synchronous>, transform_indices = @transform_16, window_bounds = array<i64: 64, 32>}, {pipeline_mode = #tpu.pipeline_mode<synchronous>, transform_indices = @transform_17, window_bounds = array<i64: 1, 32>}, {transform_indices = @transform_18, window_bounds = array<i64: 1, 8, 32>}]} {
    %c8_i32 = arith.constant 8 : i32
    %0 = arith.muli %arg1, %c8_i32 : i32
    %1 = tpu.assume_multiple %0, 8 : i32
    %c0 = arith.constant 0 : index
    %c0_0 = arith.constant 0 : index
    %c0_1 = arith.constant 0 : index
    %2 = vector.load %arg2[%c0, %c0_0, %c0_1] : memref<1x8x32xf32, #tpu.memory_space<vmem>>, vector<1x8x32xf32>
    %3 = vector.shape_cast %2 : vector<1x8x32xf32> to vector<8x32xf32>
    %c0_2 = arith.constant 0 : index
    %4 = arith.index_cast %1 : i32 to index
    %c0_3 = arith.constant 0 : index
    %5 = vector.load %arg2[%c0_2, %4, %c0_3] : memref<1x8x32xf32, #tpu.memory_space<vmem>>, vector<1x8x32xf32>
    %6 = vector.shape_cast %5 : vector<1x8x32xf32> to vector<8x32xf32>
    %c0_4 = arith.constant 0 : index
    %c0_5 = arith.constant 0 : index
    %c0_6 = arith.constant 0 : index
    %c0_7 = arith.constant 0 : index
    %7 = vector.load %arg3[%c0_4, %c0_5, %c0_6, %c0_7] : memref<1x1x8x8xbf16, #tpu.memory_space<vmem>>, vector<1x1x8x8xbf16>
    %8 = vector.shape_cast %7 : vector<1x1x8x8xbf16> to vector<8x8xbf16>
    %9 = arith.extf %8 : vector<8x8xbf16> to vector<8x8xf32>
    %cst = arith.constant dense<0.000000e+00> : vector<8xf32>
    %10 = vector.multi_reduction <add>, %3, %cst [1] : vector<8x32xf32> to vector<8xf32>
    %11 = vector.shape_cast %10 : vector<8xf32> to vector<8x1xf32>
    %cst_8 = arith.constant 3.200000e+01 : f32
    %12 = vector.broadcast %cst_8 : f32 to vector<8x1xf32>
    %13 = arith.divf %11, %12 : vector<8x1xf32>
    %14 = vector.broadcast %13 : vector<8x1xf32> to vector<8x32xf32>
    %15 = arith.subf %3, %14 : vector<8x32xf32>
    %16 = arith.mulf %15, %15 : vector<8x32xf32>
    %cst_9 = arith.constant dense<0.000000e+00> : vector<8xf32>
    %17 = vector.multi_reduction <add>, %16, %cst_9 [1] : vector<8x32xf32> to vector<8xf32>
    %18 = vector.shape_cast %17 : vector<8xf32> to vector<8x1xf32>
    %cst_10 = arith.constant 0.0322580636 : f32
    %19 = vector.broadcast %cst_10 : f32 to vector<8x1xf32>
    %20 = arith.mulf %18, %19 : vector<8x1xf32>
    %21 = math.sqrt %20 : vector<8x1xf32>
    %cst_11 = arith.constant 9.99999997E-7 : f32
    %22 = vector.broadcast %cst_11 : f32 to vector<8x1xf32>
    %23 = arith.addf %21, %22 : vector<8x1xf32>
    %24 = tpu.reciprocal %23 {approx = true} : vector<8x1xf32> -> vector<8x1xf32>
    %c0_12 = arith.constant 0 : index
    %c0_13 = arith.constant 0 : index
    %25 = vector.load %arg4[%c0_12, %c0_13] : memref<1x32xf32, #tpu.memory_space<vmem>>, vector<1x32xf32>
    %26 = vector.shape_cast %25 : vector<1x32xf32> to vector<32xf32>
    %27 = vector.broadcast %13 : vector<8x1xf32> to vector<8x32xf32>
    %28 = arith.subf %3, %27 : vector<8x32xf32>
    %29 = vector.shape_cast %26 : vector<32xf32> to vector<1x32xf32>
    %30 = vector.broadcast %29 : vector<1x32xf32> to vector<8x32xf32>
    %31 = arith.mulf %30, %28 : vector<8x32xf32>
    %32 = vector.broadcast %24 : vector<8x1xf32> to vector<8x32xf32>
    %33 = arith.mulf %31, %32 : vector<8x32xf32>
    %c0_14 = arith.constant 0 : index
    %c0_15 = arith.constant 0 : index
    %34 = vector.load %arg5[%c0_14, %c0_15] : memref<1x32xf32, #tpu.memory_space<vmem>>, vector<1x32xf32>
    %35 = vector.shape_cast %34 : vector<1x32xf32> to vector<32xf32>
    %36 = vector.shape_cast %35 : vector<32xf32> to vector<1x32xf32>
    %37 = vector.broadcast %36 : vector<1x32xf32> to vector<8x32xf32>
    %38 = arith.addf %33, %37 : vector<8x32xf32>
    %39 = arith.truncf %38 : vector<8x32xf32> to vector<8x32xbf16>
    %cst_16 = arith.constant dense<0.000000e+00> : vector<8xf32>
    %40 = vector.multi_reduction <add>, %6, %cst_16 [1] : vector<8x32xf32> to vector<8xf32>
    %41 = vector.shape_cast %40 : vector<8xf32> to vector<8x1xf32>
    %cst_17 = arith.constant 3.200000e+01 : f32
    %42 = vector.broadcast %cst_17 : f32 to vector<8x1xf32>
    %43 = arith.divf %41, %42 : vector<8x1xf32>
    %44 = vector.broadcast %43 : vector<8x1xf32> to vector<8x32xf32>
    %45 = arith.subf %6, %44 : vector<8x32xf32>
    %46 = arith.mulf %45, %45 : vector<8x32xf32>
    %cst_18 = arith.constant dense<0.000000e+00> : vector<8xf32>
    %47 = vector.multi_reduction <add>, %46, %cst_18 [1] : vector<8x32xf32> to vector<8xf32>
    %48 = vector.shape_cast %47 : vector<8xf32> to vector<8x1xf32>
    %cst_19 = arith.constant 0.0322580636 : f32
    %49 = vector.broadcast %cst_19 : f32 to vector<8x1xf32>
    %50 = arith.mulf %48, %49 : vector<8x1xf32>
    %51 = math.sqrt %50 : vector<8x1xf32>
    %cst_20 = arith.constant 9.99999997E-7 : f32
    %52 = vector.broadcast %cst_20 : f32 to vector<8x1xf32>
    %53 = arith.addf %51, %52 : vector<8x1xf32>
    %54 = tpu.reciprocal %53 {approx = true} : vector<8x1xf32> -> vector<8x1xf32>
    %c0_21 = arith.constant 0 : index
    %c0_22 = arith.constant 0 : index
    %55 = vector.load %arg4[%c0_21, %c0_22] : memref<1x32xf32, #tpu.memory_space<vmem>>, vector<1x32xf32>
    %56 = vector.shape_cast %55 : vector<1x32xf32> to vector<32xf32>
    %57 = vector.broadcast %43 : vector<8x1xf32> to vector<8x32xf32>
    %58 = arith.subf %6, %57 : vector<8x32xf32>
    %59 = vector.shape_cast %56 : vector<32xf32> to vector<1x32xf32>
    %60 = vector.broadcast %59 : vector<1x32xf32> to vector<8x32xf32>
    %61 = arith.mulf %60, %58 : vector<8x32xf32>
    %62 = vector.broadcast %54 : vector<8x1xf32> to vector<8x32xf32>
    %63 = arith.mulf %61, %62 : vector<8x32xf32>
    %c0_23 = arith.constant 0 : index
    %c0_24 = arith.constant 0 : index
    %64 = vector.load %arg5[%c0_23, %c0_24] : memref<1x32xf32, #tpu.memory_space<vmem>>, vector<1x32xf32>
    %65 = vector.shape_cast %64 : vector<1x32xf32> to vector<32xf32>
    %66 = vector.shape_cast %65 : vector<32xf32> to vector<1x32xf32>
    %67 = vector.broadcast %66 : vector<1x32xf32> to vector<8x32xf32>
    %68 = arith.addf %63, %67 : vector<8x32xf32>
    %69 = arith.truncf %68 : vector<8x32xf32> to vector<8x32xbf16>
    %c0_25 = arith.constant 0 : index
    %c0_26 = arith.constant 0 : index
    %70 = vector.load %arg6[%c0_25, %c0_26] : memref<32x32xbf16, #tpu.memory_space<vmem>>, vector<32x32xbf16>
    %cst_27 = arith.constant dense<0.000000e+00> : vector<8x32xf32>
    %71 = tpu.matmul %69, %70, %cst_27 {dimension_numbers = #tpu.dot_dimension_numbers<[1], [0], [0], [1], [0, 0, 1, 1], [], []>} : vector<8x32xbf16>, vector<32x32xbf16>, vector<8x32xf32> -> vector<8x32xf32>
    %c0_28 = arith.constant 0 : index
    %c0_29 = arith.constant 0 : index
    %72 = vector.load %arg7[%c0_28, %c0_29] : memref<1x32xf32, #tpu.memory_space<vmem>>, vector<1x32xf32>
    %73 = vector.shape_cast %72 : vector<1x32xf32> to vector<32xf32>
    %74 = vector.shape_cast %73 : vector<32xf32> to vector<1x32xf32>
    %75 = vector.broadcast %74 : vector<1x32xf32> to vector<8x32xf32>
    %76 = arith.addf %71, %75 : vector<8x32xf32>
    %77 = arith.truncf %76 : vector<8x32xf32> to vector<8x32xbf16>
    %c0_30 = arith.constant 0 : index
    %c0_31 = arith.constant 0 : index
    %78 = vector.load %arg8[%c0_30, %c0_31] : memref<32x32xbf16, #tpu.memory_space<vmem>>, vector<32x32xbf16>
    %cst_32 = arith.constant dense<0.000000e+00> : vector<8x32xf32>
    %79 = tpu.matmul %39, %78, %cst_32 {dimension_numbers = #tpu.dot_dimension_numbers<[1], [0], [0], [1], [0, 0, 1, 1], [], []>} : vector<8x32xbf16>, vector<32x32xbf16>, vector<8x32xf32> -> vector<8x32xf32>
    %c0_33 = arith.constant 0 : index
    %c0_34 = arith.constant 0 : index
    %80 = vector.load %arg9[%c0_33, %c0_34] : memref<1x32xf32, #tpu.memory_space<vmem>>, vector<1x32xf32>
    %81 = vector.shape_cast %80 : vector<1x32xf32> to vector<32xf32>
    %82 = vector.shape_cast %81 : vector<32xf32> to vector<1x32xf32>
    %83 = vector.broadcast %82 : vector<1x32xf32> to vector<8x32xf32>
    %84 = arith.addf %79, %83 : vector<8x32xf32>
    %85 = arith.truncf %84 : vector<8x32xf32> to vector<8x32xbf16>
    %c0_35 = arith.constant 0 : index
    %c0_36 = arith.constant 0 : index
    %86 = vector.load %arg10[%c0_35, %c0_36] : memref<32x32xbf16, #tpu.memory_space<vmem>>, vector<32x32xbf16>
    %cst_37 = arith.constant dense<0.000000e+00> : vector<8x32xf32>
    %87 = tpu.matmul %39, %86, %cst_37 {dimension_numbers = #tpu.dot_dimension_numbers<[1], [0], [0], [1], [0, 0, 1, 1], [], []>} : vector<8x32xbf16>, vector<32x32xbf16>, vector<8x32xf32> -> vector<8x32xf32>
    %c0_38 = arith.constant 0 : index
    %c0_39 = arith.constant 0 : index
    %88 = vector.load %arg11[%c0_38, %c0_39] : memref<1x32xf32, #tpu.memory_space<vmem>>, vector<1x32xf32>
    %89 = vector.shape_cast %88 : vector<1x32xf32> to vector<32xf32>
    %90 = vector.shape_cast %89 : vector<32xf32> to vector<1x32xf32>
    %91 = vector.broadcast %90 : vector<1x32xf32> to vector<8x32xf32>
    %92 = arith.addf %87, %91 : vector<8x32xf32>
    %93 = arith.truncf %92 : vector<8x32xf32> to vector<8x32xbf16>
    %cst_40 = arith.constant 0.000000e+00 : f32
    %94 = vector.broadcast %cst_40 : f32 to vector<8x32xf32>
    %95 = vector.extract_strided_slice %77 {offsets = [0, 0], sizes = [8, 8], strides = [1, 1]} : vector<8x32xbf16> to vector<8x8xbf16>
    %96 = vector.extract_strided_slice %85 {offsets = [0, 0], sizes = [8, 8], strides = [1, 1]} : vector<8x32xbf16> to vector<8x8xbf16>
    %97 = vector.extract_strided_slice %93 {offsets = [0, 0], sizes = [8, 8], strides = [1, 1]} : vector<8x32xbf16> to vector<8x8xbf16>
    %cst_41 = arith.constant dense<0.000000e+00> : vector<8x8xf32>
    %98 = tpu.matmul %95, %96, %cst_41 {dimension_numbers = #tpu.dot_dimension_numbers<[1], [1], [0], [0], [0, 0, 1, 0], [], []>} : vector<8x8xbf16>, vector<8x8xbf16>, vector<8x8xf32> -> vector<8x8xf32>
    %cst_42 = arith.constant 0.353553385 : f32
    %99 = vector.broadcast %cst_42 : f32 to vector<8x8xf32>
    %100 = arith.mulf %98, %99 : vector<8x8xf32>
    %101 = arith.addf %100, %9 : vector<8x8xf32>
    %cst_43 = arith.constant dense<0xFF800000> : vector<8xf32>
    %102 = vector.multi_reduction <maximumf>, %101, %cst_43 [1] : vector<8x8xf32> to vector<8xf32>
    %103 = vector.shape_cast %102 : vector<8xf32> to vector<8x1xf32>
    %104 = vector.broadcast %103 : vector<8x1xf32> to vector<8x8xf32>
    %105 = arith.subf %101, %104 : vector<8x8xf32>
    %106 = math.exp %105 : vector<8x8xf32>
    %cst_44 = arith.constant dense<0.000000e+00> : vector<8xf32>
    %107 = vector.multi_reduction <add>, %106, %cst_44 [1] : vector<8x8xf32> to vector<8xf32>
    %108 = vector.shape_cast %107 : vector<8xf32> to vector<8x1xf32>
    %109 = tpu.reciprocal %108 {approx = true} : vector<8x1xf32> -> vector<8x1xf32>
    %110 = vector.broadcast %109 : vector<8x1xf32> to vector<8x8xf32>
    %111 = arith.mulf %106, %110 : vector<8x8xf32>
    %112 = arith.truncf %111 : vector<8x8xf32> to vector<8x8xbf16>
    %cst_45 = arith.constant dense<0.000000e+00> : vector<8x8xf32>
    %113 = tpu.matmul %112, %97, %cst_45 {dimension_numbers = #tpu.dot_dimension_numbers<[1], [0], [0], [1], [0, 0, 1, 1], [], []>} : vector<8x8xbf16>, vector<8x8xbf16>, vector<8x8xf32> -> vector<8x8xf32>
    %114 = arith.truncf %113 : vector<8x8xf32> to vector<8x8xbf16>
    %c0_46 = arith.constant 0 : index
    %c0_47 = arith.constant 0 : index
    %c0_48 = arith.constant 0 : index
    %115 = vector.load %arg12[%c0_46, %c0_47, %c0_48] : memref<4x8x32xbf16, #tpu.memory_space<vmem>>, vector<1x8x32xbf16>
    %116 = vector.shape_cast %115 : vector<1x8x32xbf16> to vector<8x32xbf16>
    %cst_49 = arith.constant dense<0.000000e+00> : vector<8x32xf32>
    %117 = tpu.matmul %114, %116, %cst_49 {dimension_numbers = #tpu.dot_dimension_numbers<[1], [0], [0], [1], [0, 0, 1, 1], [], []>} : vector<8x8xbf16>, vector<8x32xbf16>, vector<8x32xf32> -> vector<8x32xf32>
    %118 = arith.addf %94, %117 : vector<8x32xf32>
    %119 = vector.extract_strided_slice %77 {offsets = [0, 8], sizes = [8, 8], strides = [1, 1]} : vector<8x32xbf16> to vector<8x8xbf16>
    %120 = vector.extract_strided_slice %85 {offsets = [0, 8], sizes = [8, 8], strides = [1, 1]} : vector<8x32xbf16> to vector<8x8xbf16>
    %121 = vector.extract_strided_slice %93 {offsets = [0, 8], sizes = [8, 8], strides = [1, 1]} : vector<8x32xbf16> to vector<8x8xbf16>
    %cst_50 = arith.constant dense<0.000000e+00> : vector<8x8xf32>
    %122 = tpu.matmul %119, %120, %cst_50 {dimension_numbers = #tpu.dot_dimension_numbers<[1], [1], [0], [0], [0, 0, 1, 0], [], []>} : vector<8x8xbf16>, vector<8x8xbf16>, vector<8x8xf32> -> vector<8x8xf32>
    %cst_51 = arith.constant 0.353553385 : f32
    %123 = vector.broadcast %cst_51 : f32 to vector<8x8xf32>
    %124 = arith.mulf %122, %123 : vector<8x8xf32>
    %125 = arith.addf %124, %9 : vector<8x8xf32>
    %cst_52 = arith.constant dense<0xFF800000> : vector<8xf32>
    %126 = vector.multi_reduction <maximumf>, %125, %cst_52 [1] : vector<8x8xf32> to vector<8xf32>
    %127 = vector.shape_cast %126 : vector<8xf32> to vector<8x1xf32>
    %128 = vector.broadcast %127 : vector<8x1xf32> to vector<8x8xf32>
    %129 = arith.subf %125, %128 : vector<8x8xf32>
    %130 = math.exp %129 : vector<8x8xf32>
    %cst_53 = arith.constant dense<0.000000e+00> : vector<8xf32>
    %131 = vector.multi_reduction <add>, %130, %cst_53 [1] : vector<8x8xf32> to vector<8xf32>
    %132 = vector.shape_cast %131 : vector<8xf32> to vector<8x1xf32>
    %133 = tpu.reciprocal %132 {approx = true} : vector<8x1xf32> -> vector<8x1xf32>
    %134 = vector.broadcast %133 : vector<8x1xf32> to vector<8x8xf32>
    %135 = arith.mulf %130, %134 : vector<8x8xf32>
    %136 = arith.truncf %135 : vector<8x8xf32> to vector<8x8xbf16>
    %cst_54 = arith.constant dense<0.000000e+00> : vector<8x8xf32>
    %137 = tpu.matmul %136, %121, %cst_54 {dimension_numbers = #tpu.dot_dimension_numbers<[1], [0], [0], [1], [0, 0, 1, 1], [], []>} : vector<8x8xbf16>, vector<8x8xbf16>, vector<8x8xf32> -> vector<8x8xf32>
    %138 = arith.truncf %137 : vector<8x8xf32> to vector<8x8xbf16>
    %c1 = arith.constant 1 : index
    %c0_55 = arith.constant 0 : index
    %c0_56 = arith.constant 0 : index
    %139 = vector.load %arg12[%c1, %c0_55, %c0_56] : memref<4x8x32xbf16, #tpu.memory_space<vmem>>, vector<1x8x32xbf16>
    %140 = vector.shape_cast %139 : vector<1x8x32xbf16> to vector<8x32xbf16>
    %cst_57 = arith.constant dense<0.000000e+00> : vector<8x32xf32>
    %141 = tpu.matmul %138, %140, %cst_57 {dimension_numbers = #tpu.dot_dimension_numbers<[1], [0], [0], [1], [0, 0, 1, 1], [], []>} : vector<8x8xbf16>, vector<8x32xbf16>, vector<8x32xf32> -> vector<8x32xf32>
    %142 = arith.addf %118, %141 : vector<8x32xf32>
    %143 = vector.extract_strided_slice %77 {offsets = [0, 16], sizes = [8, 8], strides = [1, 1]} : vector<8x32xbf16> to vector<8x8xbf16>
    %144 = vector.extract_strided_slice %85 {offsets = [0, 16], sizes = [8, 8], strides = [1, 1]} : vector<8x32xbf16> to vector<8x8xbf16>
    %145 = vector.extract_strided_slice %93 {offsets = [0, 16], sizes = [8, 8], strides = [1, 1]} : vector<8x32xbf16> to vector<8x8xbf16>
    %cst_58 = arith.constant dense<0.000000e+00> : vector<8x8xf32>
    %146 = tpu.matmul %143, %144, %cst_58 {dimension_numbers = #tpu.dot_dimension_numbers<[1], [1], [0], [0], [0, 0, 1, 0], [], []>} : vector<8x8xbf16>, vector<8x8xbf16>, vector<8x8xf32> -> vector<8x8xf32>
    %cst_59 = arith.constant 0.353553385 : f32
    %147 = vector.broadcast %cst_59 : f32 to vector<8x8xf32>
    %148 = arith.mulf %146, %147 : vector<8x8xf32>
    %149 = arith.addf %148, %9 : vector<8x8xf32>
    %cst_60 = arith.constant dense<0xFF800000> : vector<8xf32>
    %150 = vector.multi_reduction <maximumf>, %149, %cst_60 [1] : vector<8x8xf32> to vector<8xf32>
    %151 = vector.shape_cast %150 : vector<8xf32> to vector<8x1xf32>
    %152 = vector.broadcast %151 : vector<8x1xf32> to vector<8x8xf32>
    %153 = arith.subf %149, %152 : vector<8x8xf32>
    %154 = math.exp %153 : vector<8x8xf32>
    %cst_61 = arith.constant dense<0.000000e+00> : vector<8xf32>
    %155 = vector.multi_reduction <add>, %154, %cst_61 [1] : vector<8x8xf32> to vector<8xf32>
    %156 = vector.shape_cast %155 : vector<8xf32> to vector<8x1xf32>
    %157 = tpu.reciprocal %156 {approx = true} : vector<8x1xf32> -> vector<8x1xf32>
    %158 = vector.broadcast %157 : vector<8x1xf32> to vector<8x8xf32>
    %159 = arith.mulf %154, %158 : vector<8x8xf32>
    %160 = arith.truncf %159 : vector<8x8xf32> to vector<8x8xbf16>
    %cst_62 = arith.constant dense<0.000000e+00> : vector<8x8xf32>
    %161 = tpu.matmul %160, %145, %cst_62 {dimension_numbers = #tpu.dot_dimension_numbers<[1], [0], [0], [1], [0, 0, 1, 1], [], []>} : vector<8x8xbf16>, vector<8x8xbf16>, vector<8x8xf32> -> vector<8x8xf32>
    %162 = arith.truncf %161 : vector<8x8xf32> to vector<8x8xbf16>
    %c2 = arith.constant 2 : index
    %c0_63 = arith.constant 0 : index
    %c0_64 = arith.constant 0 : index
    %163 = vector.load %arg12[%c2, %c0_63, %c0_64] : memref<4x8x32xbf16, #tpu.memory_space<vmem>>, vector<1x8x32xbf16>
    %164 = vector.shape_cast %163 : vector<1x8x32xbf16> to vector<8x32xbf16>
    %cst_65 = arith.constant dense<0.000000e+00> : vector<8x32xf32>
    %165 = tpu.matmul %162, %164, %cst_65 {dimension_numbers = #tpu.dot_dimension_numbers<[1], [0], [0], [1], [0, 0, 1, 1], [], []>} : vector<8x8xbf16>, vector<8x32xbf16>, vector<8x32xf32> -> vector<8x32xf32>
    %166 = arith.addf %142, %165 : vector<8x32xf32>
    %167 = vector.extract_strided_slice %77 {offsets = [0, 24], sizes = [8, 8], strides = [1, 1]} : vector<8x32xbf16> to vector<8x8xbf16>
    %168 = vector.extract_strided_slice %85 {offsets = [0, 24], sizes = [8, 8], strides = [1, 1]} : vector<8x32xbf16> to vector<8x8xbf16>
    %169 = vector.extract_strided_slice %93 {offsets = [0, 24], sizes = [8, 8], strides = [1, 1]} : vector<8x32xbf16> to vector<8x8xbf16>
    %cst_66 = arith.constant dense<0.000000e+00> : vector<8x8xf32>
    %170 = tpu.matmul %167, %168, %cst_66 {dimension_numbers = #tpu.dot_dimension_numbers<[1], [1], [0], [0], [0, 0, 1, 0], [], []>} : vector<8x8xbf16>, vector<8x8xbf16>, vector<8x8xf32> -> vector<8x8xf32>
    %cst_67 = arith.constant 0.353553385 : f32
    %171 = vector.broadcast %cst_67 : f32 to vector<8x8xf32>
    %172 = arith.mulf %170, %171 : vector<8x8xf32>
    %173 = arith.addf %172, %9 : vector<8x8xf32>
    %cst_68 = arith.constant dense<0xFF800000> : vector<8xf32>
    %174 = vector.multi_reduction <maximumf>, %173, %cst_68 [1] : vector<8x8xf32> to vector<8xf32>
    %175 = vector.shape_cast %174 : vector<8xf32> to vector<8x1xf32>
    %176 = vector.broadcast %175 : vector<8x1xf32> to vector<8x8xf32>
    %177 = arith.subf %173, %176 : vector<8x8xf32>
    %178 = math.exp %177 : vector<8x8xf32>
    %cst_69 = arith.constant dense<0.000000e+00> : vector<8xf32>
    %179 = vector.multi_reduction <add>, %178, %cst_69 [1] : vector<8x8xf32> to vector<8xf32>
    %180 = vector.shape_cast %179 : vector<8xf32> to vector<8x1xf32>
    %181 = tpu.reciprocal %180 {approx = true} : vector<8x1xf32> -> vector<8x1xf32>
    %182 = vector.broadcast %181 : vector<8x1xf32> to vector<8x8xf32>
    %183 = arith.mulf %178, %182 : vector<8x8xf32>
    %184 = arith.truncf %183 : vector<8x8xf32> to vector<8x8xbf16>
    %cst_70 = arith.constant dense<0.000000e+00> : vector<8x8xf32>
    %185 = tpu.matmul %184, %169, %cst_70 {dimension_numbers = #tpu.dot_dimension_numbers<[1], [0], [0], [1], [0, 0, 1, 1], [], []>} : vector<8x8xbf16>, vector<8x8xbf16>, vector<8x8xf32> -> vector<8x8xf32>
    %186 = arith.truncf %185 : vector<8x8xf32> to vector<8x8xbf16>
    %c3 = arith.constant 3 : index
    %c0_71 = arith.constant 0 : index
    %c0_72 = arith.constant 0 : index
    %187 = vector.load %arg12[%c3, %c0_71, %c0_72] : memref<4x8x32xbf16, #tpu.memory_space<vmem>>, vector<1x8x32xbf16>
    %188 = vector.shape_cast %187 : vector<1x8x32xbf16> to vector<8x32xbf16>
    %cst_73 = arith.constant dense<0.000000e+00> : vector<8x32xf32>
    %189 = tpu.matmul %186, %188, %cst_73 {dimension_numbers = #tpu.dot_dimension_numbers<[1], [0], [0], [1], [0, 0, 1, 1], [], []>} : vector<8x8xbf16>, vector<8x32xbf16>, vector<8x32xf32> -> vector<8x32xf32>
    %190 = arith.addf %166, %189 : vector<8x32xf32>
    %191 = arith.addf %6, %190 : vector<8x32xf32>
    %c0_74 = arith.constant 0 : index
    %c0_75 = arith.constant 0 : index
    %192 = vector.load %arg13[%c0_74, %c0_75] : memref<1x32xf32, #tpu.memory_space<vmem>>, vector<1x32xf32>
    %193 = vector.shape_cast %192 : vector<1x32xf32> to vector<32xf32>
    %194 = vector.shape_cast %193 : vector<32xf32> to vector<1x32xf32>
    %195 = vector.broadcast %194 : vector<1x32xf32> to vector<8x32xf32>
    %196 = arith.addf %191, %195 : vector<8x32xf32>
    %cst_76 = arith.constant dense<0.000000e+00> : vector<8xf32>
    %197 = vector.multi_reduction <add>, %196, %cst_76 [1] : vector<8x32xf32> to vector<8xf32>
    %198 = vector.shape_cast %197 : vector<8xf32> to vector<8x1xf32>
    %cst_77 = arith.constant 3.200000e+01 : f32
    %199 = vector.broadcast %cst_77 : f32 to vector<8x1xf32>
    %200 = arith.divf %198, %199 : vector<8x1xf32>
    %201 = vector.broadcast %200 : vector<8x1xf32> to vector<8x32xf32>
    %202 = arith.subf %196, %201 : vector<8x32xf32>
    %203 = arith.mulf %202, %202 : vector<8x32xf32>
    %cst_78 = arith.constant dense<0.000000e+00> : vector<8xf32>
    %204 = vector.multi_reduction <add>, %203, %cst_78 [1] : vector<8x32xf32> to vector<8xf32>
    %205 = vector.shape_cast %204 : vector<8xf32> to vector<8x1xf32>
    %cst_79 = arith.constant 0.0322580636 : f32
    %206 = vector.broadcast %cst_79 : f32 to vector<8x1xf32>
    %207 = arith.mulf %205, %206 : vector<8x1xf32>
    %208 = math.sqrt %207 : vector<8x1xf32>
    %cst_80 = arith.constant 9.99999997E-7 : f32
    %209 = vector.broadcast %cst_80 : f32 to vector<8x1xf32>
    %210 = arith.addf %208, %209 : vector<8x1xf32>
    %211 = tpu.reciprocal %210 {approx = true} : vector<8x1xf32> -> vector<8x1xf32>
    %c0_81 = arith.constant 0 : index
    %c0_82 = arith.constant 0 : index
    %212 = vector.load %arg14[%c0_81, %c0_82] : memref<1x32xf32, #tpu.memory_space<vmem>>, vector<1x32xf32>
    %213 = vector.shape_cast %212 : vector<1x32xf32> to vector<32xf32>
    %214 = vector.broadcast %200 : vector<8x1xf32> to vector<8x32xf32>
    %215 = arith.subf %196, %214 : vector<8x32xf32>
    %216 = vector.shape_cast %213 : vector<32xf32> to vector<1x32xf32>
    %217 = vector.broadcast %216 : vector<1x32xf32> to vector<8x32xf32>
    %218 = arith.mulf %217, %215 : vector<8x32xf32>
    %219 = vector.broadcast %211 : vector<8x1xf32> to vector<8x32xf32>
    %220 = arith.mulf %218, %219 : vector<8x32xf32>
    %c0_83 = arith.constant 0 : index
    %c0_84 = arith.constant 0 : index
    %221 = vector.load %arg15[%c0_83, %c0_84] : memref<1x32xf32, #tpu.memory_space<vmem>>, vector<1x32xf32>
    %222 = vector.shape_cast %221 : vector<1x32xf32> to vector<32xf32>
    %223 = vector.shape_cast %222 : vector<32xf32> to vector<1x32xf32>
    %224 = vector.broadcast %223 : vector<1x32xf32> to vector<8x32xf32>
    %225 = arith.addf %220, %224 : vector<8x32xf32>
    %226 = arith.truncf %225 : vector<8x32xf32> to vector<8x32xbf16>
    %c0_85 = arith.constant 0 : index
    %c0_86 = arith.constant 0 : index
    %227 = vector.load %arg16[%c0_85, %c0_86] : memref<32x64xbf16, #tpu.memory_space<vmem>>, vector<32x64xbf16>
    %cst_87 = arith.constant dense<0.000000e+00> : vector<8x64xf32>
    %228 = tpu.matmul %226, %227, %cst_87 {dimension_numbers = #tpu.dot_dimension_numbers<[1], [0], [0], [1], [0, 0, 1, 1], [], []>} : vector<8x32xbf16>, vector<32x64xbf16>, vector<8x64xf32> -> vector<8x64xf32>
    %c0_88 = arith.constant 0 : index
    %c0_89 = arith.constant 0 : index
    %229 = vector.load %arg17[%c0_88, %c0_89] : memref<1x64xf32, #tpu.memory_space<vmem>>, vector<1x64xf32>
    %230 = vector.shape_cast %229 : vector<1x64xf32> to vector<64xf32>
    %231 = vector.shape_cast %230 : vector<64xf32> to vector<1x64xf32>
    %232 = vector.broadcast %231 : vector<1x64xf32> to vector<8x64xf32>
    %233 = arith.addf %228, %232 : vector<8x64xf32>
    %cst_90 = arith.constant 0.000000e+00 : f32
    %234 = vector.broadcast %cst_90 : f32 to vector<8x64xf32>
    %235 = arith.maximumf %233, %234 : vector<8x64xf32>
    %236 = arith.truncf %235 : vector<8x64xf32> to vector<8x64xbf16>
    %c0_91 = arith.constant 0 : index
    %c0_92 = arith.constant 0 : index
    %237 = vector.load %arg18[%c0_91, %c0_92] : memref<64x32xbf16, #tpu.memory_space<vmem>>, vector<64x32xbf16>
    %cst_93 = arith.constant dense<0.000000e+00> : vector<8x32xf32>
    %238 = tpu.matmul %236, %237, %cst_93 {dimension_numbers = #tpu.dot_dimension_numbers<[1], [0], [0], [1], [0, 0, 1, 1], [], []>} : vector<8x64xbf16>, vector<64x32xbf16>, vector<8x32xf32> -> vector<8x32xf32>
    %c0_94 = arith.constant 0 : index
    %c0_95 = arith.constant 0 : index
    %239 = vector.load %arg19[%c0_94, %c0_95] : memref<1x32xf32, #tpu.memory_space<vmem>>, vector<1x32xf32>
    %240 = vector.shape_cast %239 : vector<1x32xf32> to vector<32xf32>
    %241 = vector.shape_cast %240 : vector<32xf32> to vector<1x32xf32>
    %242 = vector.broadcast %241 : vector<1x32xf32> to vector<8x32xf32>
    %243 = arith.addf %238, %242 : vector<8x32xf32>
    %244 = arith.addf %196, %243 : vector<8x32xf32>
    %c0_96 = arith.constant 0 : index
    %c0_97 = arith.constant 0 : index
    %c0_98 = arith.constant 0 : index
    %245 = vector.load %arg20[%c0_96, %c0_97, %c0_98] : memref<1x8x32xf32, #tpu.memory_space<vmem>>, vector<1x8x32xf32>
    %246 = vector.shape_cast %245 : vector<1x8x32xf32> to vector<8x32xf32>
    %247 = vector.shape_cast %244 : vector<8x32xf32> to vector<1x8x32xf32>
    tpu.vector_store %arg20[%c0_96, %c0_97, %c0_98], %247 {strides = array<i32>} : memref<1x8x32xf32, #tpu.memory_space<vmem>>, vector<1x8x32xf32>,
    return
  }
  func.func @transform_0(%arg0: i32, %arg1: i32) -> (i32, i32, i32) {
    %c0_i32 = arith.constant 0 : i32
    %c0_i32_0 = arith.constant 0 : i32
    %c0_i32_1 = arith.constant 0 : i32
    return %arg0, %c0_i32, %c0_i32_0 : i32, i32, i32
  }
  func.func @transform_1(%arg0: i32, %arg1: i32) -> (i32, i32, i32, i32) {
    %c0_i32 = arith.constant 0 : i32
    %c0_i32_0 = arith.constant 0 : i32
    %c0_i32_1 = arith.constant 0 : i32
    return %arg0, %c0_i32, %arg1, %c0_i32_0 : i32, i32, i32, i32
  }
  func.func @transform_2(%arg0: i32, %arg1: i32) -> (i32, i32) {
    %c0_i32 = arith.constant 0 : i32
    %c0_i32_0 = arith.constant 0 : i32
    %c0_i32_1 = arith.constant 0 : i32
    return %c0_i32, %c0_i32_0 : i32, i32
  }
  func.func @transform_3(%arg0: i32, %arg1: i32) -> (i32, i32) {
    %c0_i32 = arith.constant 0 : i32
    %c0_i32_0 = arith.constant 0 : i32
    %c0_i32_1 = arith.constant 0 : i32
    return %c0_i32, %c0_i32_0 : i32, i32
  }
  func.func @transform_4(%arg0: i32, %arg1: i32) -> (i32, i32) {
    %c0_i32 = arith.constant 0 : i32
    %c0_i32_0 = arith.constant 0 : i32
    %c0_i32_1 = arith.constant 0 : i32
    return %c0_i32, %c0_i32_0 : i32, i32
  }
  func.func @transform_5(%arg0: i32, %arg1: i32) -> (i32, i32) {
    %c0_i32 = arith.constant 0 : i32
    %c0_i32_0 = arith.constant 0 : i32
    %c0_i32_1 = arith.constant 0 : i32
    return %c0_i32, %c0_i32_0 : i32, i32
  }
  func.func @transform_6(%arg0: i32, %arg1: i32) -> (i32, i32) {
    %c0_i32 = arith.constant 0 : i32
    %c0_i32_0 = arith.constant 0 : i32
    %c0_i32_1 = arith.constant 0 : i32
    return %c0_i32, %c0_i32_0 : i32, i32
  }
  func.func @transform_7(%arg0: i32, %arg1: i32) -> (i32, i32) {
    %c0_i32 = arith.constant 0 : i32
    %c0_i32_0 = arith.constant 0 : i32
    %c0_i32_1 = arith.constant 0 : i32
    return %c0_i32, %c0_i32_0 : i32, i32
  }
  func.func @transform_8(%arg0: i32, %arg1: i32) -> (i32, i32) {
    %c0_i32 = arith.constant 0 : i32
    %c0_i32_0 = arith.constant 0 : i32
    %c0_i32_1 = arith.constant 0 : i32
    return %c0_i32, %c0_i32_0 : i32, i32
  }
  func.func @transform_9(%arg0: i32, %arg1: i32) -> (i32, i32) {
    %c0_i32 = arith.constant 0 : i32
    %c0_i32_0 = arith.constant 0 : i32
    %c0_i32_1 = arith.constant 0 : i32
    return %c0_i32, %c0_i32_0 : i32, i32
  }
  func.func @transform_10(%arg0: i32, %arg1: i32) -> (i32, i32, i32) {
    %c0_i32 = arith.constant 0 : i32
    %c0_i32_0 = arith.constant 0 : i32
    %c0_i32_1 = arith.constant 0 : i32
    %c0_i32_2 = arith.constant 0 : i32
    return %c0_i32, %c0_i32_0, %c0_i32_1 : i32, i32, i32
  }
  func.func @transform_11(%arg0: i32, %arg1: i32) -> (i32, i32) {
    %c0_i32 = arith.constant 0 : i32
    %c0_i32_0 = arith.constant 0 : i32
    %c0_i32_1 = arith.constant 0 : i32
    return %c0_i32, %c0_i32_0 : i32, i32
  }
  func.func @transform_12(%arg0: i32, %arg1: i32) -> (i32, i32) {
    %c0_i32 = arith.constant 0 : i32
    %c0_i32_0 = arith.constant 0 : i32
    %c0_i32_1 = arith.constant 0 : i32
    return %c0_i32, %c0_i32_0 : i32, i32
  }
  func.func @transform_13(%arg0: i32, %arg1: i32) -> (i32, i32) {
    %c0_i32 = arith.constant 0 : i32
    %c0_i32_0 = arith.constant 0 : i32
    %c0_i32_1 = arith.constant 0 : i32
    return %c0_i32, %c0_i32_0 : i32, i32
  }
  func.func @transform_14(%arg0: i32, %arg1: i32) -> (i32, i32) {
    %c0_i32 = arith.constant 0 : i32
    %c0_i32_0 = arith.constant 0 : i32
    %c0_i32_1 = arith.constant 0 : i32
    return %c0_i32, %c0_i32_0 : i32, i32
  }
  func.func @transform_15(%arg0: i32, %arg1: i32) -> (i32, i32) {
    %c0_i32 = arith.constant 0 : i32
    %c0_i32_0 = arith.constant 0 : i32
    %c0_i32_1 = arith.constant 0 : i32
    return %c0_i32, %c0_i32_0 : i32, i32
  }
  func.func @transform_16(%arg0: i32, %arg1: i32) -> (i32, i32) {
    %c0_i32 = arith.constant 0 : i32
    %c0_i32_0 = arith.constant 0 : i32
    %c0_i32_1 = arith.constant 0 : i32
    return %c0_i32, %c0_i32_0 : i32, i32
  }
  func.func @transform_17(%arg0: i32, %arg1: i32) -> (i32, i32) {
    %c0_i32 = arith.constant 0 : i32
    %c0_i32_0 = arith.constant 0 : i32
    %c0_i32_1 = arith.constant 0 : i32
    return %c0_i32, %c0_i32_0 : i32, i32
  }
  func.func @transform_18(%arg0: i32, %arg1: i32) -> (i32, i32, i32) {
    %c0_i32 = arith.constant 0 : i32
    %c0_i32_0 = arith.constant 0 : i32
    return %arg0, %arg1, %c0_i32 : i32, i32, i32
  }
}

</mosaic_0001>

<llo_original>
// kernel: tpu_custom_call.1
$region0: #{tpu_custom_call.1}
  #allocation0 [shape = 'u32[]', space=smem, size = 0x4, offset = 0x4, fixed_abs, tag = 'smem constant byte address 0x4 - core index']
  #allocation1 [shape = 'u32[144,128]{1,0:T(1,128)}', space=vmem, size = 0x12000, scoped, tag = 'internal scratch']
  %s0 = inlined_call_operand.vmem [shape: f32[2,8,32], index: 0, kind: input, shape index: {}]
  %s1 = inlined_call_operand.hbm [shape: bf16[2,1,8,8], index: 1, kind: input, shape index: {}]
  %s2 = inlined_call_operand.vmem [shape: f32[1,32], index: 2, kind: input, shape index: {}]
  %s3 = inlined_call_operand.hbm [shape: f32[1,32], index: 3, kind: input, shape index: {}]
  %s4 = inlined_call_operand.vmem [shape: bf16[32,32], index: 4, kind: input, shape index: {}]
  %s5 = inlined_call_operand.hbm [shape: f32[1,32], index: 5, kind: input, shape index: {}]
  %s6 = inlined_call_operand.vmem [shape: bf16[32,32], index: 6, kind: input, shape index: {}]
  %s7 = inlined_call_operand.hbm [shape: f32[1,32], index: 7, kind: input, shape index: {}]
  %s8 = inlined_call_operand.hbm [shape: bf16[32,32], index: 8, kind: input, shape index: {}]
  %s9 = inlined_call_operand.hbm [shape: f32[1,32], index: 9, kind: input, shape index: {}]
  %s10 = inlined_call_operand.vmem [shape: bf16[4,8,32], index: 10, kind: input, shape index: {}]
  %s11 = inlined_call_operand.hbm [shape: f32[1,32], index: 11, kind: input, shape index: {}]
  %s12 = inlined_call_operand.hbm [shape: f32[1,32], index: 12, kind: input, shape index: {}]
  %s13 = inlined_call_operand.hbm [shape: f32[1,32], index: 13, kind: input, shape index: {}]
  %s14 = inlined_call_operand.vmem [shape: bf16[32,64], index: 14, kind: input, shape index: {}]
  %s15 = inlined_call_operand.vmem [shape: f32[1,64], index: 15, kind: input, shape index: {}]
  %s16 = inlined_call_operand.vmem [shape: bf16[64,32], index: 16, kind: input, shape index: {}]
  %s17 = inlined_call_operand.vmem [shape: f32[1,32], index: 17, kind: input, shape index: {}]
  %s18 = inlined_call_operand.hbm [shape: f32[2,8,32], index: 18, kind: output, shape index: {}]
  %s19 = sld [smem:[#allocation0]]
  $region141: #{tpu_custom_call.1} parent=0
    _
  %s21 = ssub.s32 1, %s19
  %s22 = scalar_select 0, %s21, %s19
  $region1: #{tpu_custom_call.1} parent=0
    #allocation2 [shape = 'u8[4096]{0}', space=vmem, size = 0x1000, scoped, tag = 'input window, operand 1']
    #allocation3 [shape = 's32[2]{0}', space=sflag, size = 0x8, scoped, tag = 'scoped memory for tpu_custom_call.1']
    #allocation4 [shape = 's32[2]{0}', space=sflag, size = 0x8, scoped, tag = 'scoped memory for tpu_custom_call.1']
    #allocation5 [shape = 'u8[512]{0}', space=vmem, size = 0x400, scoped, tag = 'input window, operand 3, single buffered']
    #allocation6 [shape = 's32[1]{0}', space=sflag, size = 0x4, scoped, tag = 'scoped memory for tpu_custom_call.1']
    #allocation7 [shape = 'u8[512]{0}', space=vmem, size = 0x400, scoped, tag = 'input window, operand 5, single buffered']
    #allocation8 [shape = 'u8[512]{0}', space=vmem, size = 0x400, scoped, tag = 'input window, operand 7, single buffered']
    #allocation9 [shape = 's32[1]{0}', space=sflag, size = 0x4, scoped, tag = 'scoped memory for tpu_custom_call.1']
    #allocation10 [shape = 'u8[8192]{0}', space=vmem, size = 0x2000, scoped, tag = 'input window, operand 8, single buffered']
    #allocation11 [shape = 'u8[512]{0}', space=vmem, size = 0x400, scoped, tag = 'input window, operand 9, single buffered']
    #allocation12 [shape = 's32[1]{0}', space=sflag, size = 0x4, scoped, tag = 'scoped memory for tpu_custom_call.1']
    #allocation13 [shape = 'u8[512]{0}', space=vmem, size = 0x400, scoped, tag = 'input window, operand 11, single buffered']
    #allocation14 [shape = 'u8[512]{0}', space=vmem, size = 0x400, scoped, tag = 'input window, operand 12, single buffered']
    #allocation15 [shape = 's32[1]{0}', space=sflag, size = 0x4, scoped, tag = 'scoped memory for tpu_custom_call.1']
    #allocation16 [shape = 'u8[512]{0}', space=vmem, size = 0x400, scoped, tag = 'input window, operand 13, single buffered']
    #allocation17 [shape = 'u8[8192]{0}', space=vmem, size = 0x2000, scoped, tag = 'output window, operand 0']
    %23 = vsyncpa [#allocation3], 0
    %s24 = scalar_lea.sflag [#allocation3], 1
    %25 = vsyncpa %s24, 0
    %26 = vsyncpa [#allocation6], 0
    %27 = vsyncpa [#allocation9], 0
    %28 = vsyncpa [#allocation12], 0
    %29 = vsyncpa [#allocation15], 0
    %30 = vsyncpa [#allocation4], 0
    %s31 = scalar_lea.sflag [#allocation4], 1
    %32 = vsyncpa %s31, 0
    loop: start=0, step=1, limit=4
    $region2: #{tpu_custom_call.1} parent=1 // loop_pre_header
      _
    $region3: #{tpu_custom_call.1} parent=1 // loop_header
      %s34 = sphi 0, %s38
      %p35 = scmp.ge.s32.totalorder %s34, 4
      %s41 = sphi 0, %s53
      %s42 = sphi 0, %s49
      %s43 = sphi 0, %s41
      %s44 = sphi 0, %s42
      %s45 = sphi 0, %s43
      %s46 = sphi 0, %s44
      %s56 = sphi 0, %s58
      %s59 = sphi 0, %s56
      %s60 = sphi 0, %s59
      %s76 = sphi 0, %s60
      %s84 = sphi 0, %s86
      %s87 = sphi 0, %s84
      %s88 = sphi 0, %s87
      %s104 = sphi 0, %s88
      %s108 = sphi 0, %s108
      %s110 = sphi 0, %s108
      %s111 = sphi 0, %s110
      %s125 = sphi 0, %s111
      %s129 = sphi 0, %s129
      %s131 = sphi 0, %s129
      %s132 = sphi 0, %s131
      %s146 = sphi 0, %s132
      %s150 = sphi 0, %s150
      %s152 = sphi 0, %s150
      %s153 = sphi 0, %s152
      %s167 = sphi 0, %s153
      %s171 = sphi 0, %s171
      %s173 = sphi 0, %s171
      %s174 = sphi 0, %s173
      %s188 = sphi 0, %s174
      %s192 = sphi 0, %s192
      %s194 = sphi 0, %s192
      %s195 = sphi 0, %s194
      %s209 = sphi 0, %s195
      %s213 = sphi 0, %s213
      %s215 = sphi 0, %s213
      %s216 = sphi 0, %s215
      %s230 = sphi 0, %s216
      %s234 = sphi 0, %s234
      %s236 = sphi 0, %s234
      %s237 = sphi 0, %s236
      %s251 = sphi 0, %s237
      %s255 = sphi 0, %s255
      %s257 = sphi 0, %s255
      %s258 = sphi 0, %s257
      %s272 = sphi 0, %s258
      %s276 = sphi 0, %s276
      %s278 = sphi 0, %s276
      %s279 = sphi 0, %s278
      %s293 = sphi 0, %s279
      %s297 = sphi 0, %s297
      %s299 = sphi 0, %s297
      %s300 = sphi 0, %s299
      %s314 = sphi 0, %s300
      %s318 = sphi 0, %s318
      %s320 = sphi 0, %s318
      %s321 = sphi 0, %s320
      %s335 = sphi 0, %s321
      %s339 = sphi 0, %s339
      %s341 = sphi 0, %s339
      %s342 = sphi 0, %s341
      %s356 = sphi 0, %s342
      %s360 = sphi 0, %s360
      %s362 = sphi 0, %s360
      %s363 = sphi 0, %s362
      %s377 = sphi 0, %s363
      %s381 = sphi 0, %s381
      %s383 = sphi 0, %s381
      %s384 = sphi 0, %s383
      %s398 = sphi 0, %s384
      %s402 = sphi 0, %s402
      %s404 = sphi 0, %s402
      %s405 = sphi 0, %s404
      %s419 = sphi 0, %s405
      %s423 = sphi 0, %s423
      %s425 = sphi 0, %s423
      %s426 = sphi 0, %s425
      %s440 = sphi 0, %s426
      %s448 = sphi 0, %s450
      %s451 = sphi 0, %s448
      %s452 = sphi 0, %s451
      %s468 = sphi 0, %s452
    $region4: #{tpu_custom_call.1} parent=1 // loop_header_branch
      %37 = sbr.rel (%p35) target = $region8
    $region5: #{tpu_custom_call.1} parent=1 // loop_body
      %s39 = ssub.s32 %s34, 1
      %s40 = ssub.s32 %s34, 2
      %s47 = sadd.s32 1, %s42
      %p48 = scmp.ge.s32.totalorder %s47, 1
      %s49 = scalar_select %p48, 0, %s47
      %s50 = sadd.s32 1, %s41
      %s51 = scalar_select %p48, %s50, %s41
      %p52 = scmp.ge.s32.totalorder %s51, 2
      %s53 = scalar_select %p52, 0, %s51
      %s54 = ssub.s32 %s41, %s53
      %p55 = scmp.eq.s32.totalorder %s54, 0
      %s57 = sadd.s32 %s56, 1
      %s58 = scalar_select %p55, %s56, %s57
      %p61 = pneg %p55
      %p62 = scmp.eq.s32.totalorder %s34, 1
      %p63 = por %p61, %p62
      %p64 = scmp.ne.s32.totalorder %s56, %s59
      %p65 = scmp.eq.s32.totalorder %s34, 0
      %p66 = por %p64, %p65
      %p67 = scmp.ne.s32.totalorder %s56, %s59
      %p68 = scmp.eq.s32.totalorder %s39, 1
      %p69 = por %p67, %p68
      %p70 = scmp.ne.s32.totalorder %s59, %s60
      %p71 = scmp.eq.s32.totalorder %s39, 0
      %p72 = por %p70, %p71
      %p73 = scmp.ne.s32.totalorder %s59, %s60
      %p74 = scmp.eq.s32.totalorder %s40, 1
      %p75 = por %p73, %p74
      %p77 = scmp.ne.s32.totalorder %s60, %s76
      %p78 = scmp.eq.s32.totalorder %s40, 0
      %p79 = por %p77, %p78
      %s80 = ssub.s32 %s41, %s53
      %s81 = ssub.s32 %s42, %s49
      %s82 = sor.u32 %s80, %s81
      %p83 = scmp.eq.s32.totalorder %s82, 0
      %s85 = sadd.s32 %s84, 1
      %s86 = scalar_select %p83, %s84, %s85
      %p89 = pneg %p83
      %p90 = scmp.eq.s32.totalorder %s34, 1
      %p91 = por %p89, %p90
      %p92 = scmp.ne.s32.totalorder %s84, %s87
      %p93 = scmp.eq.s32.totalorder %s34, 0
      %p94 = por %p92, %p93
      %p95 = scmp.ne.s32.totalorder %s84, %s87
      %p96 = scmp.eq.s32.totalorder %s39, 1
      %p97 = por %p95, %p96
      %p98 = scmp.ne.s32.totalorder %s87, %s88
      %p99 = scmp.eq.s32.totalorder %s39, 0
      %p100 = por %p98, %p99
      %p101 = scmp.ne.s32.totalorder %s87, %s88
      %p102 = scmp.eq.s32.totalorder %s40, 1
      %p103 = por %p101, %p102
      %p105 = scmp.ne.s32.totalorder %s88, %s104
      %p106 = scmp.eq.s32.totalorder %s40, 0
      %p107 = por %p105, %p106
      %s109 = sadd.s32 %s108, 1
      %p112 = scmp.eq.s32.totalorder %s34, 1
      %p113 = scmp.ne.s32.totalorder %s108, %s110
      %p114 = scmp.eq.s32.totalorder %s34, 0
      %p115 = por %p113, %p114
      %p116 = scmp.ne.s32.totalorder %s108, %s110
      %p117 = scmp.eq.s32.totalorder %s39, 1
      %p118 = por %p116, %p117
      %p119 = scmp.ne.s32.totalorder %s110, %s111
      %p120 = scmp.eq.s32.totalorder %s39, 0
      %p121 = por %p119, %p120
      %p122 = scmp.ne.s32.totalorder %s110, %s111
      %p123 = scmp.eq.s32.totalorder %s40, 1
      %p124 = por %p122, %p123
      %p126 = scmp.ne.s32.totalorder %s111, %s125
      %p127 = scmp.eq.s32.totalorder %s40, 0
      %p128 = por %p126, %p127
      %s130 = sadd.s32 %s129, 1
      %p133 = scmp.eq.s32.totalorder %s34, 1
      %p134 = scmp.ne.s32.totalorder %s129, %s131
      %p135 = scmp.eq.s32.totalorder %s34, 0
      %p136 = por %p134, %p135
      %p137 = scmp.ne.s32.totalorder %s129, %s131
      %p138 = scmp.eq.s32.totalorder %s39, 1
      %p139 = por %p137, %p138
      %p140 = scmp.ne.s32.totalorder %s131, %s132
      %p141 = scmp.eq.s32.totalorder %s39, 0
      %p142 = por %p140, %p141
      %p143 = scmp.ne.s32.totalorder %s131, %s132
      %p144 = scmp.eq.s32.totalorder %s40, 1
      %p145 = por %p143, %p144
      %p147 = scmp.ne.s32.totalorder %s132, %s146
      %p148 = scmp.eq.s32.totalorder %s40, 0
      %p149 = por %p147, %p148
      %s151 = sadd.s32 %s150, 1
      %p154 = scmp.eq.s32.totalorder %s34, 1
      %p155 = scmp.ne.s32.totalorder %s150, %s152
      %p156 = scmp.eq.s32.totalorder %s34, 0
      %p157 = por %p155, %p156
      %p158 = scmp.ne.s32.totalorder %s150, %s152
      %p159 = scmp.eq.s32.totalorder %s39, 1
      %p160 = por %p158, %p159
      %p161 = scmp.ne.s32.totalorder %s152, %s153
      %p162 = scmp.eq.s32.totalorder %s39, 0
      %p163 = por %p161, %p162
      %p164 = scmp.ne.s32.totalorder %s152, %s153
      %p165 = scmp.eq.s32.totalorder %s40, 1
      %p166 = por %p164, %p165
      %p168 = scmp.ne.s32.totalorder %s153, %s167
      %p169 = scmp.eq.s32.totalorder %s40, 0
      %p170 = por %p168, %p169
      %s172 = sadd.s32 %s171, 1
      %p175 = scmp.eq.s32.totalorder %s34, 1
      %p176 = scmp.ne.s32.totalorder %s171, %s173
      %p177 = scmp.eq.s32.totalorder %s34, 0
      %p178 = por %p176, %p177
      %p179 = scmp.ne.s32.totalorder %s171, %s173
      %p180 = scmp.eq.s32.totalorder %s39, 1
      %p181 = por %p179, %p180
      %p182 = scmp.ne.s32.totalorder %s173, %s174
      %p183 = scmp.eq.s32.totalorder %s39, 0
      %p184 = por %p182, %p183
      %p185 = scmp.ne.s32.totalorder %s173, %s174
      %p186 = scmp.eq.s32.totalorder %s40, 1
      %p187 = por %p185, %p186
      %p189 = scmp.ne.s32.totalorder %s174, %s188
      %p190 = scmp.eq.s32.totalorder %s40, 0
      %p191 = por %p189, %p190
      %s193 = sadd.s32 %s192, 1
      %p196 = scmp.eq.s32.totalorder %s34, 1
      %p197 = scmp.ne.s32.totalorder %s192, %s194
      %p198 = scmp.eq.s32.totalorder %s34, 0
      %p199 = por %p197, %p198
      %p200 = scmp.ne.s32.totalorder %s192, %s194
      %p201 = scmp.eq.s32.totalorder %s39, 1
      %p202 = por %p200, %p201
      %p203 = scmp.ne.s32.totalorder %s194, %s195
      %p204 = scmp.eq.s32.totalorder %s39, 0
      %p205 = por %p203, %p204
      %p206 = scmp.ne.s32.totalorder %s194, %s195
      %p207 = scmp.eq.s32.totalorder %s40, 1
      %p208 = por %p206, %p207
      %p210 = scmp.ne.s32.totalorder %s195, %s209
      %p211 = scmp.eq.s32.totalorder %s40, 0
      %p212 = por %p210, %p211
      %s214 = sadd.s32 %s213, 1
      %p217 = scmp.eq.s32.totalorder %s34, 1
      %p218 = scmp.ne.s32.totalorder %s213, %s215
      %p219 = scmp.eq.s32.totalorder %s34, 0
      %p220 = por %p218, %p219
      %p221 = scmp.ne.s32.totalorder %s213, %s215
      %p222 = scmp.eq.s32.totalorder %s39, 1
      %p223 = por %p221, %p222
      %p224 = scmp.ne.s32.totalorder %s215, %s216
      %p225 = scmp.eq.s32.totalorder %s39, 0
      %p226 = por %p224, %p225
      %p227 = scmp.ne.s32.totalorder %s215, %s216
      %p228 = scmp.eq.s32.totalorder %s40, 1
      %p229 = por %p227, %p228
      %p231 = scmp.ne.s32.totalorder %s216, %s230
      %p232 = scmp.eq.s32.totalorder %s40, 0
      %p233 = por %p231, %p232
      %s235 = sadd.s32 %s234, 1
      %p238 = scmp.eq.s32.totalorder %s34, 1
      %p239 = scmp.ne.s32.totalorder %s234, %s236
      %p240 = scmp.eq.s32.totalorder %s34, 0
      %p241 = por %p239, %p240
      %p242 = scmp.ne.s32.totalorder %s234, %s236
      %p243 = scmp.eq.s32.totalorder %s39, 1
      %p244 = por %p242, %p243
      %p245 = scmp.ne.s32.totalorder %s236, %s237
      %p246 = scmp.eq.s32.totalorder %s39, 0
      %p247 = por %p245, %p246
      %p248 = scmp.ne.s32.totalorder %s236, %s237
      %p249 = scmp.eq.s32.totalorder %s40, 1
      %p250 = por %p248, %p249
      %p252 = scmp.ne.s32.totalorder %s237, %s251
      %p253 = scmp.eq.s32.totalorder %s40, 0
      %p254 = por %p252, %p253
      %s256 = sadd.s32 %s255, 1
      %p259 = scmp.eq.s32.totalorder %s34, 1
      %p260 = scmp.ne.s32.totalorder %s255, %s257
      %p261 = scmp.eq.s32.totalorder %s34, 0
      %p262 = por %p260, %p261
      %p263 = scmp.ne.s32.totalorder %s255, %s257
      %p264 = scmp.eq.s32.totalorder %s39, 1
      %p265 = por %p263, %p264
      %p266 = scmp.ne.s32.totalorder %s257, %s258
      %p267 = scmp.eq.s32.totalorder %s39, 0
      %p268 = por %p266, %p267
      %p269 = scmp.ne.s32.totalorder %s257, %s258
      %p270 = scmp.eq.s32.totalorder %s40, 1
      %p271 = por %p269, %p270
      %p273 = scmp.ne.s32.totalorder %s258, %s272
      %p274 = scmp.eq.s32.totalorder %s40, 0
      %p275 = por %p273, %p274
      %s277 = sadd.s32 %s276, 1
      %p280 = scmp.eq.s32.totalorder %s34, 1
      %p281 = scmp.ne.s32.totalorder %s276, %s278
      %p282 = scmp.eq.s32.totalorder %s34, 0
      %p283 = por %p281, %p282
      %p284 = scmp.ne.s32.totalorder %s276, %s278
      %p285 = scmp.eq.s32.totalorder %s39, 1
      %p286 = por %p284, %p285
      %p287 = scmp.ne.s32.totalorder %s278, %s279
      %p288 = scmp.eq.s32.totalorder %s39, 0
      %p289 = por %p287, %p288
      %p290 = scmp.ne.s32.totalorder %s278, %s279
      %p291 = scmp.eq.s32.totalorder %s40, 1
      %p292 = por %p290, %p291
      %p294 = scmp.ne.s32.totalorder %s279, %s293
      %p295 = scmp.eq.s32.totalorder %s40, 0
      %p296 = por %p294, %p295
      %s298 = sadd.s32 %s297, 1
      %p301 = scmp.eq.s32.totalorder %s34, 1
      %p302 = scmp.ne.s32.totalorder %s297, %s299
      %p303 = scmp.eq.s32.totalorder %s34, 0
      %p304 = por %p302, %p303
      %p305 = scmp.ne.s32.totalorder %s297, %s299
      %p306 = scmp.eq.s32.totalorder %s39, 1
      %p307 = por %p305, %p306
      %p308 = scmp.ne.s32.totalorder %s299, %s300
      %p309 = scmp.eq.s32.totalorder %s39, 0
      %p310 = por %p308, %p309
      %p311 = scmp.ne.s32.totalorder %s299, %s300
      %p312 = scmp.eq.s32.totalorder %s40, 1
      %p313 = por %p311, %p312
      %p315 = scmp.ne.s32.totalorder %s300, %s314
      %p316 = scmp.eq.s32.totalorder %s40, 0
      %p317 = por %p315, %p316
      %s319 = sadd.s32 %s318, 1
      %p322 = scmp.eq.s32.totalorder %s34, 1
      %p323 = scmp.ne.s32.totalorder %s318, %s320
      %p324 = scmp.eq.s32.totalorder %s34, 0
      %p325 = por %p323, %p324
      %p326 = scmp.ne.s32.totalorder %s318, %s320
      %p327 = scmp.eq.s32.totalorder %s39, 1
      %p328 = por %p326, %p327
      %p329 = scmp.ne.s32.totalorder %s320, %s321
      %p330 = scmp.eq.s32.totalorder %s39, 0
      %p331 = por %p329, %p330
      %p332 = scmp.ne.s32.totalorder %s320, %s321
      %p333 = scmp.eq.s32.totalorder %s40, 1
      %p334 = por %p332, %p333
      %p336 = scmp.ne.s32.totalorder %s321, %s335
      %p337 = scmp.eq.s32.totalorder %s40, 0
      %p338 = por %p336, %p337
      %s340 = sadd.s32 %s339, 1
      %p343 = scmp.eq.s32.totalorder %s34, 1
      %p344 = scmp.ne.s32.totalorder %s339, %s341
      %p345 = scmp.eq.s32.totalorder %s34, 0
      %p346 = por %p344, %p345
      %p347 = scmp.ne.s32.totalorder %s339, %s341
      %p348 = scmp.eq.s32.totalorder %s39, 1
      %p349 = por %p347, %p348
      %p350 = scmp.ne.s32.totalorder %s341, %s342
      %p351 = scmp.eq.s32.totalorder %s39, 0
      %p352 = por %p350, %p351
      %p353 = scmp.ne.s32.totalorder %s341, %s342
      %p354 = scmp.eq.s32.totalorder %s40, 1
      %p355 = por %p353, %p354
      %p357 = scmp.ne.s32.totalorder %s342, %s356
      %p358 = scmp.eq.s32.totalorder %s40, 0
      %p359 = por %p357, %p358
      %s361 = sadd.s32 %s360, 1
      %p364 = scmp.eq.s32.totalorder %s34, 1
      %p365 = scmp.ne.s32.totalorder %s360, %s362
      %p366 = scmp.eq.s32.totalorder %s34, 0
      %p367 = por %p365, %p366
      %p368 = scmp.ne.s32.totalorder %s360, %s362
      %p369 = scmp.eq.s32.totalorder %s39, 1
      %p370 = por %p368, %p369
      %p371 = scmp.ne.s32.totalorder %s362, %s363
      %p372 = scmp.eq.s32.totalorder %s39, 0
      %p373 = por %p371, %p372
      %p374 = scmp.ne.s32.totalorder %s362, %s363
      %p375 = scmp.eq.s32.totalorder %s40, 1
      %p376 = por %p374, %p375
      %p378 = scmp.ne.s32.totalorder %s363, %s377
      %p379 = scmp.eq.s32.totalorder %s40, 0
      %p380 = por %p378, %p379
      %s382 = sadd.s32 %s381, 1
      %p385 = scmp.eq.s32.totalorder %s34, 1
      %p386 = scmp.ne.s32.totalorder %s381, %s383
      %p387 = scmp.eq.s32.totalorder %s34, 0
      %p388 = por %p386, %p387
      %p389 = scmp.ne.s32.totalorder %s381, %s383
      %p390 = scmp.eq.s32.totalorder %s39, 1
      %p391 = por %p389, %p390
      %p392 = scmp.ne.s32.totalorder %s383, %s384
      %p393 = scmp.eq.s32.totalorder %s39, 0
      %p394 = por %p392, %p393
      %p395 = scmp.ne.s32.totalorder %s383, %s384
      %p396 = scmp.eq.s32.totalorder %s40, 1
      %p397 = por %p395, %p396
      %p399 = scmp.ne.s32.totalorder %s384, %s398
      %p400 = scmp.eq.s32.totalorder %s40, 0
      %p401 = por %p399, %p400
      %s403 = sadd.s32 %s402, 1
      %p406 = scmp.eq.s32.totalorder %s34, 1
      %p407 = scmp.ne.s32.totalorder %s402, %s404
      %p408 = scmp.eq.s32.totalorder %s34, 0
      %p409 = por %p407, %p408
      %p410 = scmp.ne.s32.totalorder %s402, %s404
      %p411 = scmp.eq.s32.totalorder %s39, 1
      %p412 = por %p410, %p411
      %p413 = scmp.ne.s32.totalorder %s404, %s405
      %p414 = scmp.eq.s32.totalorder %s39, 0
      %p415 = por %p413, %p414
      %p416 = scmp.ne.s32.totalorder %s404, %s405
      %p417 = scmp.eq.s32.totalorder %s40, 1
      %p418 = por %p416, %p417
      %p420 = scmp.ne.s32.totalorder %s405, %s419
      %p421 = scmp.eq.s32.totalorder %s40, 0
      %p422 = por %p420, %p421
      %s424 = sadd.s32 %s423, 1
      %p427 = scmp.eq.s32.totalorder %s34, 1
      %p428 = scmp.ne.s32.totalorder %s423, %s425
      %p429 = scmp.eq.s32.totalorder %s34, 0
      %p430 = por %p428, %p429
      %p431 = scmp.ne.s32.totalorder %s423, %s425
      %p432 = scmp.eq.s32.totalorder %s39, 1
      %p433 = por %p431, %p432
      %p434 = scmp.ne.s32.totalorder %s425, %s426
      %p435 = scmp.eq.s32.totalorder %s39, 0
      %p436 = por %p434, %p435
      %p437 = scmp.ne.s32.totalorder %s425, %s426
      %p438 = scmp.eq.s32.totalorder %s40, 1
      %p439 = por %p437, %p438
      %p441 = scmp.ne.s32.totalorder %s426, %s440
      %p442 = scmp.eq.s32.totalorder %s40, 0
      %p443 = por %p441, %p442
      %s444 = ssub.s32 %s41, %s53
      %s445 = ssub.s32 %s42, %s49
      %s446 = sor.u32 %s444, %s445
      %p447 = scmp.eq.s32.totalorder %s446, 0
      %s449 = sadd.s32 %s448, 1
      %s450 = scalar_select %p447, %s448, %s449
      %p453 = pneg %p447
      %p454 = scmp.eq.s32.totalorder %s34, 1
      %p455 = por %p453, %p454
      %p456 = scmp.ne.s32.totalorder %s448, %s451
      %p457 = scmp.eq.s32.totalorder %s34, 0
      %p458 = por %p456, %p457
      %p459 = scmp.ne.s32.totalorder %s448, %s451
      %p460 = scmp.eq.s32.totalorder %s39, 1
      %p461 = por %p459, %p460
      %p462 = scmp.ne.s32.totalorder %s451, %s452
      %p463 = scmp.eq.s32.totalorder %s39, 0
      %p464 = por %p462, %p463
      %p465 = scmp.ne.s32.totalorder %s451, %s452
      %p466 = scmp.eq.s32.totalorder %s40, 1
      %p467 = por %p465, %p466
      %p469 = scmp.ne.s32.totalorder %s452, %s468
      %p470 = scmp.eq.s32.totalorder %s40, 0
      %p471 = por %p469, %p470
      %p472 = scmp.le.s32.totalorder 1, %s34
      %p473 = scmp.lt.s32.totalorder %s34, 3
      %p474 = pnand %p472, %p473
      %p475 = pneg %p474
      // Predicated region
      $region9: #{tpu_custom_call.1} parent=5 // pred_check
        _
      $region10: #{tpu_custom_call.1} parent=5 // pred_check_branch
        %477 = sbr.rel (%p474) target = $region12
      $region11: #{tpu_custom_call.1} parent=5 // pred_region
        %s478 = ssub.s32 %s34, 1
        // Predicated region
        $region13: #{tpu_custom_call.1} parent=11 // pred_check
          %p479 = pneg %p121
        $region14: #{tpu_custom_call.1} parent=11 // pred_check_branch
          %481 = sbr.rel (%p479) target = $region16
        $region15: #{tpu_custom_call.1} parent=11 // pred_region
          _
        $region16: #{tpu_custom_call.1} parent=11 // pred_fallthru
          _
        // Predicated region
        $region17: #{tpu_custom_call.1} parent=11 // pred_check
          %p482 = pneg %p142
        $region18: #{tpu_custom_call.1} parent=11 // pred_check_branch
          %484 = sbr.rel (%p482) target = $region20
        $region19: #{tpu_custom_call.1} parent=11 // pred_region
          %s486 = ssub.s32 16, 16
          %487 = vsyncadd [#allocation6], %s486
          %s489 = sshll.u32 [#allocation5], 4
          %s490 = int_to_ptr.vmem [resolvable:$true] %s489
          %492 = dma.hbm_to_vmem [thread:$0]  %s3, 16, %s490, [#allocation6]
        $region20: #{tpu_custom_call.1} parent=11 // pred_fallthru
          _
        // Predicated region
        $region21: #{tpu_custom_call.1} parent=11 // pred_check
          %p493 = pneg %p163
        $region22: #{tpu_custom_call.1} parent=11 // pred_check_branch
          %495 = sbr.rel (%p493) target = $region24
        $region23: #{tpu_custom_call.1} parent=11 // pred_region
          _
        $region24: #{tpu_custom_call.1} parent=11 // pred_fallthru
          _
        // Predicated region
        $region25: #{tpu_custom_call.1} parent=11 // pred_check
          %p496 = pneg %p184
        $region26: #{tpu_custom_call.1} parent=11 // pred_check_branch
          %498 = sbr.rel (%p496) target = $region28
        $region27: #{tpu_custom_call.1} parent=11 // pred_region
          %s500 = ssub.s32 16, 16
          %501 = vsyncadd [#allocation6], %s500
          %s503 = sshll.u32 [#allocation7], 4
          %s504 = int_to_ptr.vmem [resolvable:$true] %s503
          %506 = dma.hbm_to_vmem [thread:$0]  %s5, 16, %s504, [#allocation6]
        $region28: #{tpu_custom_call.1} parent=11 // pred_fallthru
          _
        // Predicated region
        $region29: #{tpu_custom_call.1} parent=11 // pred_check
          %p507 = pneg %p205
        $region30: #{tpu_custom_call.1} parent=11 // pred_check_branch
          %509 = sbr.rel (%p507) target = $region32
        $region31: #{tpu_custom_call.1} parent=11 // pred_region
          _
        $region32: #{tpu_custom_call.1} parent=11 // pred_fallthru
          _
        // Predicated region
        $region33: #{tpu_custom_call.1} parent=11 // pred_check
          %p510 = pneg %p226
        $region34: #{tpu_custom_call.1} parent=11 // pred_check_branch
          %512 = sbr.rel (%p510) target = $region36
        $region35: #{tpu_custom_call.1} parent=11 // pred_region
          %s514 = ssub.s32 16, 16
          %515 = vsyncadd [#allocation9], %s514
          %s517 = sshll.u32 [#allocation8], 4
          %s518 = int_to_ptr.vmem [resolvable:$true] %s517
          %520 = dma.hbm_to_vmem [thread:$0]  %s7, 16, %s518, [#allocation9]
        $region36: #{tpu_custom_call.1} parent=11 // pred_fallthru
          _
        // Predicated region
        $region37: #{tpu_custom_call.1} parent=11 // pred_check
          %p521 = pneg %p247
        $region38: #{tpu_custom_call.1} parent=11 // pred_check_branch
          %523 = sbr.rel (%p521) target = $region40
        $region39: #{tpu_custom_call.1} parent=11 // pred_region
          %s525 = ssub.s32 256, 256
          %526 = vsyncadd [#allocation9], %s525
          %s527 = sshll.u32 [#allocation10], 4
          %s528 = int_to_ptr.vmem [resolvable:$true] %s527
          %533 = dma.hbm_to_vmem [thread:$0]  %s8, 256, %s528, [#allocation9], 64, 64, 4
        $region40: #{tpu_custom_call.1} parent=11 // pred_fallthru
          _
        // Predicated region
        $region41: #{tpu_custom_call.1} parent=11 // pred_check
          %p534 = pneg %p268
        $region42: #{tpu_custom_call.1} parent=11 // pred_check_branch
          %536 = sbr.rel (%p534) target = $region44
        $region43: #{tpu_custom_call.1} parent=11 // pred_region
          %s538 = ssub.s32 16, 16
          %539 = vsyncadd [#allocation12], %s538
          %s541 = sshll.u32 [#allocation11], 4
          %s542 = int_to_ptr.vmem [resolvable:$true] %s541
          %544 = dma.hbm_to_vmem [thread:$0]  %s9, 16, %s542, [#allocation12]
        $region44: #{tpu_custom_call.1} parent=11 // pred_fallthru
          _
        // Predicated region
        $region45: #{tpu_custom_call.1} parent=11 // pred_check
          %p545 = pneg %p289
        $region46: #{tpu_custom_call.1} parent=11 // pred_check_branch
          %547 = sbr.rel (%p545) target = $region48
        $region47: #{tpu_custom_call.1} parent=11 // pred_region
          _
        $region48: #{tpu_custom_call.1} parent=11 // pred_fallthru
          _
        // Predicated region
        $region49: #{tpu_custom_call.1} parent=11 // pred_check
          %p548 = pneg %p310
        $region50: #{tpu_custom_call.1} parent=11 // pred_check_branch
          %550 = sbr.rel (%p548) target = $region52
        $region51: #{tpu_custom_call.1} parent=11 // pred_region
          %s552 = ssub.s32 16, 16
          %553 = vsyncadd [#allocation12], %s552
          %s555 = sshll.u32 [#allocation13], 4
          %s556 = int_to_ptr.vmem [resolvable:$true] %s555
          %558 = dma.hbm_to_vmem [thread:$0]  %s11, 16, %s556, [#allocation12]
        $region52: #{tpu_custom_call.1} parent=11 // pred_fallthru
          _
        // Predicated region
        $region53: #{tpu_custom_call.1} parent=11 // pred_check
          %p559 = pneg %p331
        $region54: #{tpu_custom_call.1} parent=11 // pred_check_branch
          %561 = sbr.rel (%p559) target = $region56
        $region55: #{tpu_custom_call.1} parent=11 // pred_region
          %s563 = ssub.s32 16, 16
          %564 = vsyncadd [#allocation15], %s563
          %s566 = sshll.u32 [#allocation14], 4
          %s567 = int_to_ptr.vmem [resolvable:$true] %s566
          %569 = dma.hbm_to_vmem [thread:$0]  %s12, 16, %s567, [#allocation15]
        $region56: #{tpu_custom_call.1} parent=11 // pred_fallthru
          _
        // Predicated region
        $region57: #{tpu_custom_call.1} parent=11 // pred_check
          %p570 = pneg %p352
        $region58: #{tpu_custom_call.1} parent=11 // pred_check_branch
          %572 = sbr.rel (%p570) target = $region60
        $region59: #{tpu_custom_call.1} parent=11 // pred_region
          %s574 = ssub.s32 16, 16
          %575 = vsyncadd [#allocation15], %s574
          %s577 = sshll.u32 [#allocation16], 4
          %s578 = int_to_ptr.vmem [resolvable:$true] %s577
          %580 = dma.hbm_to_vmem [thread:$0]  %s13, 16, %s578, [#allocation15]
        $region60: #{tpu_custom_call.1} parent=11 // pred_fallthru
          _
        // Predicated region
        $region61: #{tpu_custom_call.1} parent=11 // pred_check
          %p581 = pneg %p373
        $region62: #{tpu_custom_call.1} parent=11 // pred_check_branch
          %583 = sbr.rel (%p581) target = $region64
        $region63: #{tpu_custom_call.1} parent=11 // pred_region
          _
        $region64: #{tpu_custom_call.1} parent=11 // pred_fallthru
          _
        // Predicated region
        $region65: #{tpu_custom_call.1} parent=11 // pred_check
          %p584 = pneg %p394
        $region66: #{tpu_custom_call.1} parent=11 // pred_check_branch
          %586 = sbr.rel (%p584) target = $region68
        $region67: #{tpu_custom_call.1} parent=11 // pred_region
          _
        $region68: #{tpu_custom_call.1} parent=11 // pred_fallthru
          _
        // Predicated region
        $region69: #{tpu_custom_call.1} parent=11 // pred_check
          %p587 = pneg %p415
        $region70: #{tpu_custom_call.1} parent=11 // pred_check_branch
          %589 = sbr.rel (%p587) target = $region72
        $region71: #{tpu_custom_call.1} parent=11 // pred_region
          _
        $region72: #{tpu_custom_call.1} parent=11 // pred_fallthru
          _
        // Predicated region
        $region73: #{tpu_custom_call.1} parent=11 // pred_check
          %p590 = pneg %p436
        $region74: #{tpu_custom_call.1} parent=11 // pred_check_branch
          %592 = sbr.rel (%p590) target = $region76
        $region75: #{tpu_custom_call.1} parent=11 // pred_region
          _
        $region76: #{tpu_custom_call.1} parent=11 // pred_fallthru
          _
      $region12: #{tpu_custom_call.1} parent=5 // pred_fallthru
        _
      %p593 = scmp.lt.s32.totalorder %s34, 2
      // Predicated region
      $region77: #{tpu_custom_call.1} parent=5 // pred_check
        %p594 = pneg %p593
      $region78: #{tpu_custom_call.1} parent=5 // pred_check_branch
        %596 = sbr.rel (%p594) target = $region80
      $region79: #{tpu_custom_call.1} parent=5 // pred_region
        // Predicated region
        $region81: #{tpu_custom_call.1} parent=79 // pred_check
          %p597 = pneg %p66
        $region82: #{tpu_custom_call.1} parent=79 // pred_check_branch
          %599 = sbr.rel (%p597) target = $region84
        $region83: #{tpu_custom_call.1} parent=79 // pred_region
          %p600 = scmp.lt.s32.totalorder %s41, 1
          %s601 = scalar_select %p600, %s41, 1
          %s602 = smul.addr %s601, 8
          %s603 = scalar_lea.vmem %s0, %s602
        $region84: #{tpu_custom_call.1} parent=79 // pred_fallthru
          _
        // Predicated region
        $region85: #{tpu_custom_call.1} parent=79 // pred_check
          %p604 = pneg %p94
        $region86: #{tpu_custom_call.1} parent=79 // pred_check_branch
          %606 = sbr.rel (%p604) target = $region88
        $region87: #{tpu_custom_call.1} parent=79 // pred_region
          %s607 = sand.u32 %s84, 1
          %s608 = scalar_lea.sflag [#allocation3], %s607
          %s609 = sand.u32 %s84, 1
          %s610 = smul.addr %s609, 4
          %s611 = scalar_lea.vmem [#allocation2], %s610
          %s613 = ssub.s32 64, 64
          %614 = vsyncadd %s608, %s613
          %s615 = sadd.s32 %s42, %s41
          %s616 = smul.addr %s615, 64
          %s617 = scalar_lea.hbm %s1, %s616
          %s619 = sshll.u32 %s611, 4
          %s620 = int_to_ptr.vmem [resolvable:$true] %s619
          %622 = dma.hbm_to_vmem [thread:$0]  %s617, 64, %s620, %s608
        $region88: #{tpu_custom_call.1} parent=79 // pred_fallthru
          _
      $region80: #{tpu_custom_call.1} parent=5 // pred_fallthru
        _
      %p623 = scmp.le.s32.totalorder 1, %s34
      %p624 = scmp.lt.s32.totalorder %s34, 3
      %p625 = pnand %p623, %p624
      %p626 = pneg %p625
      // Predicated region
      $region89: #{tpu_custom_call.1} parent=5 // pred_check
        _
      $region90: #{tpu_custom_call.1} parent=5 // pred_check_branch
        %628 = sbr.rel (%p625) target = $region92
      $region91: #{tpu_custom_call.1} parent=5 // pred_region
        %s629 = ssub.s32 %s34, 1
        %s630 = sand.u32 %s87, 1
        %s631 = scalar_lea.sflag [#allocation3], %s630
        %s632 = sand.u32 %s87, 1
        %s633 = smul.addr %s632, 4
        %s634 = scalar_lea.vmem [#allocation2], %s633
        // Predicated region
        $region93: #{tpu_custom_call.1} parent=91 // pred_check
          %p635 = pneg %p100
        $region94: #{tpu_custom_call.1} parent=91 // pred_check_branch
          %637 = sbr.rel (%p635) target = $region96
        $region95: #{tpu_custom_call.1} parent=91 // pred_region
          %638 = dma.done %s631, 64
        $region96: #{tpu_custom_call.1} parent=91 // pred_fallthru
          _
        // Predicated region
        $region97: #{tpu_custom_call.1} parent=91 // pred_check
          %p639 = pneg %p142
        $region98: #{tpu_custom_call.1} parent=91 // pred_check_branch
          %641 = sbr.rel (%p639) target = $region100
        $region99: #{tpu_custom_call.1} parent=91 // pred_region
          %642 = dma.done [#allocation6], 16
        $region100: #{tpu_custom_call.1} parent=91 // pred_fallthru
          _
        // Predicated region
        $region101: #{tpu_custom_call.1} parent=91 // pred_check
          %p643 = pneg %p184
        $region102: #{tpu_custom_call.1} parent=91 // pred_check_branch
          %645 = sbr.rel (%p643) target = $region104
        $region103: #{tpu_custom_call.1} parent=91 // pred_region
          %646 = dma.done [#allocation6], 16
        $region104: #{tpu_custom_call.1} parent=91 // pred_fallthru
          _
        // Predicated region
        $region105: #{tpu_custom_call.1} parent=91 // pred_check
          %p647 = pneg %p226
        $region106: #{tpu_custom_call.1} parent=91 // pred_check_branch
          %649 = sbr.rel (%p647) target = $region108
        $region107: #{tpu_custom_call.1} parent=91 // pred_region
          %650 = dma.done [#allocation9], 16
        $region108: #{tpu_custom_call.1} parent=91 // pred_fallthru
          _
        // Predicated region
        $region109: #{tpu_custom_call.1} parent=91 // pred_check
          %p651 = pneg %p247
        $region110: #{tpu_custom_call.1} parent=91 // pred_check_branch
          %653 = sbr.rel (%p651) target = $region112
        $region111: #{tpu_custom_call.1} parent=91 // pred_region
          %654 = dma.done [#allocation9], 256
        $region112: #{tpu_custom_call.1} parent=91 // pred_fallthru
          _
        // Predicated region
        $region113: #{tpu_custom_call.1} parent=91 // pred_check
          %p655 = pneg %p268
        $region114: #{tpu_custom_call.1} parent=91 // pred_check_branch
          %657 = sbr.rel (%p655) target = $region116
        $region115: #{tpu_custom_call.1} parent=91 // pred_region
          %658 = dma.done [#allocation12], 16
        $region116: #{tpu_custom_call.1} parent=91 // pred_fallthru
          _
        // Predicated region
        $region117: #{tpu_custom_call.1} parent=91 // pred_check
          %p659 = pneg %p310
        $region118: #{tpu_custom_call.1} parent=91 // pred_check_branch
          %661 = sbr.rel (%p659) target = $region120
        $region119: #{tpu_custom_call.1} parent=91 // pred_region
          %662 = dma.done [#allocation12], 16
        $region120: #{tpu_custom_call.1} parent=91 // pred_fallthru
          _
        // Predicated region
        $region121: #{tpu_custom_call.1} parent=91 // pred_check
          %p663 = pneg %p331
        $region122: #{tpu_custom_call.1} parent=91 // pred_check_branch
          %665 = sbr.rel (%p663) target = $region124
        $region123: #{tpu_custom_call.1} parent=91 // pred_region
          %666 = dma.done [#allocation15], 16
        $region124: #{tpu_custom_call.1} parent=91 // pred_fallthru
          _
        // Predicated region
        $region125: #{tpu_custom_call.1} parent=91 // pred_check
          %p667 = pneg %p352
        $region126: #{tpu_custom_call.1} parent=91 // pred_check_branch
          %669 = sbr.rel (%p667) target = $region128
        $region127: #{tpu_custom_call.1} parent=91 // pred_region
          %670 = dma.done [#allocation15], 16
        $region128: #{tpu_custom_call.1} parent=91 // pred_fallthru
          _
        %p671 = scmp.lt.s32.totalorder %s43, 1
        %s672 = scalar_select %p671, %s43, 1
        %s673 = smul.addr %s672, 8
        %s674 = scalar_lea.vmem %s0, %s673
        %p675 = pneg %p72
        %p676 = pneg %p69
        %s677 = sand.u32 %s87, 1
        %s678 = scalar_lea.sflag [#allocation3], %s677
        %s679 = sand.u32 %s87, 1
        %s680 = smul.addr %s679, 4
        %s681 = scalar_lea.vmem [#allocation2], %s680
        %p682 = pneg %p100
        %p683 = pneg %p97
        %p684 = pneg %p121
        %p685 = pneg %p118
        %p686 = pneg %p142
        %p687 = pneg %p139
        %p688 = pneg %p163
        %p689 = pneg %p160
        %p690 = pneg %p184
        %p691 = pneg %p181
        %p692 = pneg %p205
        %p693 = pneg %p202
        %p694 = pneg %p226
        %p695 = pneg %p223
        %p696 = pneg %p247
        %p697 = pneg %p244
        %p698 = pneg %p268
        %p699 = pneg %p265
        %p700 = pneg %p289
        %p701 = pneg %p286
        %p702 = pneg %p310
        %p703 = pneg %p307
        %p704 = pneg %p331
        %p705 = pneg %p328
        %p706 = pneg %p352
        %p707 = pneg %p349
        %p708 = pneg %p373
        %p709 = pneg %p370
        %p710 = pneg %p394
        %p711 = pneg %p391
        %p712 = pneg %p415
        %p713 = pneg %p412
        %p714 = pneg %p436
        %p715 = pneg %p433
        %p716 = pneg %p464
        %p717 = pneg %p461
        %s718 = sand.u32 %s451, 1
        %s719 = scalar_lea.sflag [#allocation4], %s718
        %s720 = sand.u32 %s451, 1
        %s721 = smul.addr %s720, 8
        %s722 = scalar_lea.vmem [#allocation17], %s721
        %p723 = scmp.lt.s32.totalorder %s43, 1
        %s724 = scalar_select %p723, %s43, 1
        %s725 = smul.addr %s724, 8
        %s726 = scalar_lea.vmem %s0, %s725
        %s728 = smul.u32 %s44, 8
        %v729 = vld [vmem:[%s726] sm:$0xff]
        %s730 = scalar_lea.vmem %s726, %s728
        %v731 = vld [vmem:[%s730] sm:$0xff]
        %v732 = vld [vmem:[%s634] sm:$0xf]
        %v733 = vunpack.c.l.bf16 %v732
        %vm734 = vcmask 261120
        %v735 = vsel %vm734, %v729, 0.0
        %736 = vadd.xlane.f32.xlu0 %v735
        %v737 = vpop.xlane.xlu0 %736
        %v738 = vrcp.pop 32.0
        %v739 = vmul.f32 %v737, %v738
        %v740 = vsub.f32 %v729, %v739
        %v741 = vmul.f32 %v740, %v740
        %v742 = vsel %vm734, %v741, 0.0
        %743 = vadd.xlane.f32.xlu0 %v742
        %v744 = vpop.xlane.xlu0 %743
        %v745 = vmul.f32 %v744, 0.032258064
        %v746 = vrsqrt.pop %v745
        %v747 = vmul.f32 %v745, %v746
        %vm748 = vcmp.eq.f32.partialorder %v745, inf
        %v749 = vsel %vm748, %v745, %v747
        %vm750 = vcmp.eq.f32.partialorder %v745, 0.0
        %v751 = vand.u32 %v745, 2147483648
        %v752 = vsel %vm750, %v751, %v749
        %v753 = vadd.f32 %v752, 1e-06
        %v754 = vrcp.pop %v753
        %v755 = vld [vmem:[%s2] sm:$0x1]
        %v757 = vlaneseq
        %v758 = vshrl.u32 %v757, 7
        %v759 = vsub.s32 0, %v758
        %v760 = vrot.slane %v755, %v759
        %v762 = vmul.f32 %v760, %v740
        %v763 = vmul.f32 %v762, %v754
        %v764 = vld [vmem:[#allocation5] sm:$0x1]
        %v766 = vlaneseq
        %v767 = vshrl.u32 %v766, 7
        %v768 = vsub.s32 0, %v767
        %v769 = vrot.slane %v764, %v768
        %v771 = vadd.f32 %v763, %v769
        %v772 = vpack.c.bf16 %v771, %v771
        %v773 = vsel %vm734, %v731, 0.0
        %774 = vadd.xlane.f32.xlu0 %v773
        %v775 = vpop.xlane.xlu0 %774
        %v776 = vmul.f32 %v775, %v738
        %v777 = vsub.f32 %v731, %v776
        %v778 = vmul.f32 %v777, %v777
        %v779 = vsel %vm734, %v778, 0.0
        %780 = vadd.xlane.f32.xlu0 %v779
        %v781 = vpop.xlane.xlu0 %780
        %v782 = vmul.f32 %v781, 0.032258064
        %v783 = vrsqrt.pop %v782
        %v784 = vmul.f32 %v782, %v783
        %vm785 = vcmp.eq.f32.partialorder %v782, inf
        %v786 = vsel %vm785, %v782, %v784
        %vm787 = vcmp.eq.f32.partialorder %v782, 0.0
        %v788 = vand.u32 %v782, 2147483648
        %v789 = vsel %vm787, %v788, %v786
        %v790 = vadd.f32 %v789, 1e-06
        %v791 = vrcp.pop %v790
        %v792 = vmul.f32 %v760, %v777
        %v793 = vmul.f32 %v792, %v791
        %v794 = vadd.f32 %v793, %v769
        %v795 = vpack.c.bf16 %v794, %v794
        %v796 = vld [vmem:[%s4] sm:$0xf]
        %v797 = vld [vmem:[%s4 + $0x4] sm:$0xf]
        %v798 = vld [vmem:[%s4 + $0x8] sm:$0xf]
        %v799 = vld [vmem:[%s4 + $0xc] sm:$0xf]
        %v800 = vld [vmem:[#allocation7] sm:$0x1]
        %v802 = vlaneseq
        %v803 = vshrl.u32 %v802, 7
        %v804 = vsub.s32 0, %v803
        %v805 = vrot.slane %v800, %v804
        %v811 = vunpack.c.l.b16 %v796
        %v812 = vunpack.c.l.b16 %v797
        %v813 = vunpack.c.l.b16 %v798
        %v814 = vunpack.c.l.b16 %v799
        %v815 = vpack.c.b16 %v812, %v811
        %v816 = vpack.c.b16 %v814, %v813
        %v820 = vsel %vm734, %v795, 0
        %822 = vmatprep.subr.bf16.mxu0 0
        %823 = vmatpush1.bf16.msra.mxu0 %v815
        %824 = vmatprep.subr.bf16.mxu0 0
        %825 = vmatpush1.bf16.msra.mxu0 %v816
        %826 = vmatprep.subr.bf16.mxu0 0
        %827 = vmatpush1.bf16.msra.mxu0 0
        %828 = vmatprep.subr.bf16.mxu0 0
        %829 = vmatpush1.bf16.msra.mxu0 0
        %830 = vmatprep.subr.bf16.mxu0 0
        %831 = vmatpush1.bf16.msra.mxu0 0
        %832 = vmatprep.subr.bf16.mxu0 0
        %833 = vmatpush1.bf16.msra.mxu0 0
        %834 = vmatprep.subr.bf16.mxu0 0
        %835 = vmatpush1.bf16.msra.mxu0 0
        %836 = vmatprep.subr.bf16.mxu0 0
        %837 = vmatpush1.bf16.msra.mxu0 0
        %838 = vmatprep.subr.bf16.mxu0 0
        %839 = vmatpush1.bf16.msra.mxu0 0
        %840 = vmatprep.subr.bf16.mxu0 0
        %841 = vmatpush1.bf16.msra.mxu0 0
        %842 = vmatprep.subr.bf16.mxu0 0
        %843 = vmatpush1.bf16.msra.mxu0 0
        %844 = vmatprep.subr.bf16.mxu0 0
        %845 = vmatpush1.bf16.msra.mxu0 0
        %846 = vmatprep.subr.bf16.mxu0 0
        %847 = vmatpush1.bf16.msra.mxu0 0
        %848 = vmatprep.subr.bf16.mxu0 0
        %849 = vmatpush1.bf16.msra.mxu0 0
        %850 = vmatprep.subr.bf16.mxu0 0
        %851 = vmatpush1.bf16.msra.mxu0 0
        %852 = vmatprep.subr.bf16.mxu0 0
        %853 = vmatpush1.bf16.msra.mxu0 0
        %854 = vmatprep.mubr.bf16.mxu0 0
        %855 = vmatmul.mubr.bf16.gmra.mrb[0].mxu0 %v820
        %v856 = vpop.f32.mrb[0].mxu0
        %v857 = vadd.f32 %v805, %v856
        %v858 = vpop.f32.mrb[0].mxu0
        %v859 = vpop.f32.mrb[0].mxu0
        %v860 = vpop.f32.mrb[0].mxu0
        %861 = vdwg.mxu0
        %v862 = vpack.c.bf16 %v857, %v857
        %v863 = vld [vmem:[%s6] sm:$0xf]
        %v864 = vld [vmem:[%s6 + $0x4] sm:$0xf]
        %v865 = vld [vmem:[%s6 + $0x8] sm:$0xf]
        %v866 = vld [vmem:[%s6 + $0xc] sm:$0xf]
        %v867 = vld [vmem:[#allocation8] sm:$0x1]
        %v869 = vlaneseq
        %v870 = vshrl.u32 %v869, 7
        %v871 = vsub.s32 0, %v870
        %v872 = vrot.slane %v867, %v871
        %v878 = vunpack.c.l.b16 %v863
        %v879 = vunpack.c.l.b16 %v864
        %v880 = vunpack.c.l.b16 %v865
        %v881 = vunpack.c.l.b16 %v866
        %v882 = vpack.c.b16 %v879, %v878
        %v883 = vpack.c.b16 %v881, %v880
        %v887 = vsel %vm734, %v772, 0
        %889 = vmatprep.subr.bf16.mxu0 0
        %890 = vmatpush1.bf16.msra.mxu0 %v882
        %891 = vmatprep.subr.bf16.mxu0 0
        %892 = vmatpush1.bf16.msra.mxu0 %v883
        %893 = vmatprep.subr.bf16.mxu0 0
        %894 = vmatpush1.bf16.msra.mxu0 0
        %895 = vmatprep.subr.bf16.mxu0 0
        %896 = vmatpush1.bf16.msra.mxu0 0
        %897 = vmatprep.subr.bf16.mxu0 0
        %898 = vmatpush1.bf16.msra.mxu0 0
        %899 = vmatprep.subr.bf16.mxu0 0
        %900 = vmatpush1.bf16.msra.mxu0 0
        %901 = vmatprep.subr.bf16.mxu0 0
        %902 = vmatpush1.bf16.msra.mxu0 0
        %903 = vmatprep.subr.bf16.mxu0 0
        %904 = vmatpush1.bf16.msra.mxu0 0
        %905 = vmatprep.subr.bf16.mxu0 0
        %906 = vmatpush1.bf16.msra.mxu0 0
        %907 = vmatprep.subr.bf16.mxu0 0
        %908 = vmatpush1.bf16.msra.mxu0 0
        %909 = vmatprep.subr.bf16.mxu0 0
        %910 = vmatpush1.bf16.msra.mxu0 0
        %911 = vmatprep.subr.bf16.mxu0 0
        %912 = vmatpush1.bf16.msra.mxu0 0
        %913 = vmatprep.subr.bf16.mxu0 0
        %914 = vmatpush1.bf16.msra.mxu0 0
        %915 = vmatprep.subr.bf16.mxu0 0
        %916 = vmatpush1.bf16.msra.mxu0 0
        %917 = vmatprep.subr.bf16.mxu0 0
        %918 = vmatpush1.bf16.msra.mxu0 0
        %919 = vmatprep.subr.bf16.mxu0 0
        %920 = vmatpush1.bf16.msra.mxu0 0
        %921 = vmatprep.mubr.bf16.mxu0 0
        %922 = vmatmul.mubr.bf16.gmra.mrb[0].mxu0 %v887
        %v923 = vpop.f32.mrb[0].mxu0
        %v924 = vadd.f32 %v872, %v923
        %v925 = vpop.f32.mrb[0].mxu0
        %v926 = vpop.f32.mrb[0].mxu0
        %v927 = vpop.f32.mrb[0].mxu0
        %928 = vdwg.mxu0
        %v929 = vpack.c.bf16 %v924, %v924
        %v930 = vld [vmem:[#allocation10] sm:$0xf]
        %v931 = vld [vmem:[#allocation10 + $0x4] sm:$0xf]
        %v932 = vld [vmem:[#allocation10 + $0x8] sm:$0xf]
        %v933 = vld [vmem:[#allocation10 + $0xc] sm:$0xf]
        %v934 = vld [vmem:[#allocation11] sm:$0x1]
        %v936 = vlaneseq
        %v937 = vshrl.u32 %v936, 7
        %v938 = vsub.s32 0, %v937
        %v939 = vrot.slane %v934, %v938
        %v945 = vunpack.c.l.b16 %v930
        %v946 = vunpack.c.l.b16 %v931
        %v947 = vunpack.c.l.b16 %v932
        %v948 = vunpack.c.l.b16 %v933
        %v949 = vpack.c.b16 %v946, %v945
        %v950 = vpack.c.b16 %v948, %v947
        %953 = vmatprep.subr.bf16.mxu0 0
        %954 = vmatpush1.bf16.msra.mxu0 %v949
        %955 = vmatprep.subr.bf16.mxu0 0
        %956 = vmatpush1.bf16.msra.mxu0 %v950
        %957 = vmatprep.subr.bf16.mxu0 0
        %958 = vmatpush1.bf16.msra.mxu0 0
        %959 = vmatprep.subr.bf16.mxu0 0
        %960 = vmatpush1.bf16.msra.mxu0 0
        %961 = vmatprep.subr.bf16.mxu0 0
        %962 = vmatpush1.bf16.msra.mxu0 0
        %963 = vmatprep.subr.bf16.mxu0 0
        %964 = vmatpush1.bf16.msra.mxu0 0
        %965 = vmatprep.subr.bf16.mxu0 0
        %966 = vmatpush1.bf16.msra.mxu0 0
        %967 = vmatprep.subr.bf16.mxu0 0
        %968 = vmatpush1.bf16.msra.mxu0 0
        %969 = vmatprep.subr.bf16.mxu0 0
        %970 = vmatpush1.bf16.msra.mxu0 0
        %971 = vmatprep.subr.bf16.mxu0 0
        %972 = vmatpush1.bf16.msra.mxu0 0
        %973 = vmatprep.subr.bf16.mxu0 0
        %974 = vmatpush1.bf16.msra.mxu0 0
        %975 = vmatprep.subr.bf16.mxu0 0
        %976 = vmatpush1.bf16.msra.mxu0 0
        %977 = vmatprep.subr.bf16.mxu0 0
        %978 = vmatpush1.bf16.msra.mxu0 0
        %979 = vmatprep.subr.bf16.mxu0 0
        %980 = vmatpush1.bf16.msra.mxu0 0
        %981 = vmatprep.subr.bf16.mxu0 0
        %982 = vmatpush1.bf16.msra.mxu0 0
        %983 = vmatprep.subr.bf16.mxu0 0
        %984 = vmatpush1.bf16.msra.mxu0 0
        %985 = vmatprep.mubr.bf16.mxu0 0
        %986 = vmatmul.mubr.bf16.gmra.mrb[0].mxu0 %v887
        %v987 = vpop.f32.mrb[0].mxu0
        %v988 = vadd.f32 %v939, %v987
        %v989 = vpop.f32.mrb[0].mxu0
        %v990 = vpop.f32.mrb[0].mxu0
        %v991 = vpop.f32.mrb[0].mxu0
        %992 = vdwg.mxu0
        %v993 = vpack.c.bf16 %v988, %v988
        %vm994 = vcmask 64512
        %v996 = vsel %vm994, %v862, 0
        %v999 = vsel %vm994, %v929, 0
        %1001 = vmatprep.subr.bf16.mxu0 0
        %1002 = vmatpush1.bf16.xpose.msra.mxu0 %v999
        %1003 = vmatprep.subr.bf16.mxu0 0
        %1004 = vmatpush1.bf16.xpose.msra.mxu0 0
        %1005 = vmatprep.subr.bf16.mxu0 0
        %1006 = vmatpush1.bf16.xpose.msra.mxu0 0
        %1007 = vmatprep.subr.bf16.mxu0 0
        %1008 = vmatpush1.bf16.xpose.msra.mxu0 0
        %1009 = vmatprep.subr.bf16.mxu0 0
        %1010 = vmatpush1.bf16.xpose.msra.mxu0 0
        %1011 = vmatprep.subr.bf16.mxu0 0
        %1012 = vmatpush1.bf16.xpose.msra.mxu0 0
        %1013 = vmatprep.subr.bf16.mxu0 0
        %1014 = vmatpush1.bf16.xpose.msra.mxu0 0
        %1015 = vmatprep.subr.bf16.mxu0 0
        %1016 = vmatpush1.bf16.xpose.msra.mxu0 0
        %1017 = vmatprep.subr.bf16.mxu0 0
        %1018 = vmatpush1.bf16.xpose.msra.mxu0 0
        %1019 = vmatprep.subr.bf16.mxu0 0
        %1020 = vmatpush1.bf16.xpose.msra.mxu0 0
        %1021 = vmatprep.subr.bf16.mxu0 0
        %1022 = vmatpush1.bf16.xpose.msra.mxu0 0
        %1023 = vmatprep.subr.bf16.mxu0 0
        %1024 = vmatpush1.bf16.xpose.msra.mxu0 0
        %1025 = vmatprep.subr.bf16.mxu0 0
        %1026 = vmatpush1.bf16.xpose.msra.mxu0 0
        %1027 = vmatprep.subr.bf16.mxu0 0
        %1028 = vmatpush1.bf16.xpose.msra.mxu0 0
        %1029 = vmatprep.subr.bf16.mxu0 0
        %1030 = vmatpush1.bf16.xpose.msra.mxu0 0
        %1031 = vmatprep.subr.bf16.mxu0 0
        %1032 = vmatpush1.bf16.xpose.msra.mxu0 0
        %1033 = vmatprep.mubr.bf16.mxu0 0
        %1034 = vmatmul.mubr.bf16.gmra.mrb[0].mxu0 %v996
        %v1035 = vpop.f32.mrb[0].mxu0
        %v1036 = vadd.f32 0.0, %v1035
        %v1037 = vpop.f32.mrb[0].mxu0
        %v1038 = vpop.f32.mrb[0].mxu0
        %v1039 = vpop.f32.mrb[0].mxu0
        %1040 = vdwg.mxu0
        %v1041 = vmul.f32 %v1036, 0.35355338
        %v1042 = vadd.f32 %v1041, %v733
        %v1043 = vsel %vm994, %v1042, -inf
        %1044 = vmax.xlane.f32.xlu0 %v1043
        %v1045 = vpop.xlane.xlu0 %1044
        %v1046 = vsub.f32 %v1042, %v1045
        %v1047 = vmul.f32 %v1046, 1.442695
        %v1048 = vpow.pop %v1047
        %v1049 = vsel %vm994, %v1048, 0.0
        %1050 = vadd.xlane.f32.xlu0 %v1049
        %v1051 = vpop.xlane.xlu0 %1050
        %v1052 = vrcp.pop %v1051
        %v1053 = vmul.f32 %v1048, %v1052
        %v1054 = vpack.c.bf16 %v1053, %v1053
        %v1056 = vsel %vm994, %v1054, 0
        %vm1058 = vcmask 1043456
        %v1060 = vsel %vm1058, %v993, 0
        %1062 = vmatprep.subr.bf16.mxu0 0
        %1063 = vmatpush1.bf16.msra.mxu0 %v1060
        %1064 = vmatprep.subr.bf16.mxu0 0
        %1065 = vmatpush1.bf16.msra.mxu0 0
        %1066 = vmatprep.subr.bf16.mxu0 0
        %1067 = vmatpush1.bf16.msra.mxu0 0
        %1068 = vmatprep.subr.bf16.mxu0 0
        %1069 = vmatpush1.bf16.msra.mxu0 0
        %1070 = vmatprep.subr.bf16.mxu0 0
        %1071 = vmatpush1.bf16.msra.mxu0 0
        %1072 = vmatprep.subr.bf16.mxu0 0
        %1073 = vmatpush1.bf16.msra.mxu0 0
        %1074 = vmatprep.subr.bf16.mxu0 0
        %1075 = vmatpush1.bf16.msra.mxu0 0
        %1076 = vmatprep.subr.bf16.mxu0 0
        %1077 = vmatpush1.bf16.msra.mxu0 0
        %1078 = vmatprep.subr.bf16.mxu0 0
        %1079 = vmatpush1.bf16.msra.mxu0 0
        %1080 = vmatprep.subr.bf16.mxu0 0
        %1081 = vmatpush1.bf16.msra.mxu0 0
        %1082 = vmatprep.subr.bf16.mxu0 0
        %1083 = vmatpush1.bf16.msra.mxu0 0
        %1084 = vmatprep.subr.bf16.mxu0 0
        %1085 = vmatpush1.bf16.msra.mxu0 0
        %1086 = vmatprep.subr.bf16.mxu0 0
        %1087 = vmatpush1.bf16.msra.mxu0 0
        %1088 = vmatprep.subr.bf16.mxu0 0
        %1089 = vmatpush1.bf16.msra.mxu0 0
        %1090 = vmatprep.subr.bf16.mxu0 0
        %1091 = vmatpush1.bf16.msra.mxu0 0
        %1092 = vmatprep.subr.bf16.mxu0 0
        %1093 = vmatpush1.bf16.msra.mxu0 0
        %1094 = vmatprep.mubr.bf16.mxu0 0
        %1095 = vmatmul.mubr.bf16.gmra.mrb[0].mxu0 %v1056
        %v1096 = vpop.f32.mrb[0].mxu0
        %v1097 = vadd.f32 0.0, %v1096
        %v1098 = vpop.f32.mrb[0].mxu0
        %v1099 = vpop.f32.mrb[0].mxu0
        %v1100 = vpop.f32.mrb[0].mxu0
        %1101 = vdwg.mxu0
        %v1102 = vpack.c.bf16 %v1097, %v1097
        %v1103 = vld [vmem:[%s10] sm:$0xf]
        %1105 = vrot.lane.b32.xlu0 %v862, 120
        %v1106 = vpop.permute.xlu0 %1105
        %1108 = vrot.lane.b32.xlu0 %v929, 120
        %v1109 = vpop.permute.xlu0 %1108
        %v1111 = vsel %vm994, %v1106, 0
        %v1114 = vsel %vm994, %v1109, 0
        %1116 = vmatprep.subr.bf16.mxu0 0
        %1117 = vmatpush1.bf16.xpose.msra.mxu0 %v1114
        %1118 = vmatprep.subr.bf16.mxu0 0
        %1119 = vmatpush1.bf16.xpose.msra.mxu0 0
        %1120 = vmatprep.subr.bf16.mxu0 0
        %1121 = vmatpush1.bf16.xpose.msra.mxu0 0
        %1122 = vmatprep.subr.bf16.mxu0 0
        %1123 = vmatpush1.bf16.xpose.msra.mxu0 0
        %1124 = vmatprep.subr.bf16.mxu0 0
        %1125 = vmatpush1.bf16.xpose.msra.mxu0 0
        %1126 = vmatprep.subr.bf16.mxu0 0
        %1127 = vmatpush1.bf16.xpose.msra.mxu0 0
        %1128 = vmatprep.subr.bf16.mxu0 0
        %1129 = vmatpush1.bf16.xpose.msra.mxu0 0
        %1130 = vmatprep.subr.bf16.mxu0 0
        %1131 = vmatpush1.bf16.xpose.msra.mxu0 0
        %1132 = vmatprep.subr.bf16.mxu0 0
        %1133 = vmatpush1.bf16.xpose.msra.mxu0 0
        %1134 = vmatprep.subr.bf16.mxu0 0
        %1135 = vmatpush1.bf16.xpose.msra.mxu0 0
        %1136 = vmatprep.subr.bf16.mxu0 0
        %1137 = vmatpush1.bf16.xpose.msra.mxu0 0
        %1138 = vmatprep.subr.bf16.mxu0 0
        %1139 = vmatpush1.bf16.xpose.msra.mxu0 0
        %1140 = vmatprep.subr.bf16.mxu0 0
        %1141 = vmatpush1.bf16.xpose.msra.mxu0 0
        %1142 = vmatprep.subr.bf16.mxu0 0
        %1143 = vmatpush1.bf16.xpose.msra.mxu0 0
        %1144 = vmatprep.subr.bf16.mxu0 0
        %1145 = vmatpush1.bf16.xpose.msra.mxu0 0
        %1146 = vmatprep.subr.bf16.mxu0 0
        %1147 = vmatpush1.bf16.xpose.msra.mxu0 0
        %1148 = vmatprep.mubr.bf16.mxu0 0
        %1149 = vmatmul.mubr.bf16.gmra.mrb[0].mxu0 %v1111
        %v1150 = vpop.f32.mrb[0].mxu0
        %v1151 = vadd.f32 0.0, %v1150
        %v1152 = vpop.f32.mrb[0].mxu0
        %v1153 = vpop.f32.mrb[0].mxu0
        %v1154 = vpop.f32.mrb[0].mxu0
        %1155 = vdwg.mxu0
        %v1156 = vmul.f32 %v1151, 0.35355338
        %v1157 = vadd.f32 %v1156, %v733
        %v1158 = vsel %vm994, %v1157, -inf
        %1159 = vmax.xlane.f32.xlu0 %v1158
        %v1160 = vpop.xlane.xlu0 %1159
        %v1161 = vsub.f32 %v1157, %v1160
        %v1162 = vmul.f32 %v1161, 1.442695
        %v1163 = vpow.pop %v1162
        %v1164 = vsel %vm994, %v1163, 0.0
        %1165 = vadd.xlane.f32.xlu0 %v1164
        %v1166 = vpop.xlane.xlu0 %1165
        %v1167 = vrcp.pop %v1166
        %v1168 = vmul.f32 %v1163, %v1167
        %v1169 = vpack.c.bf16 %v1168, %v1168
        %1171 = vrot.lane.b32.xlu0 %v993, 120
        %v1172 = vpop.permute.xlu0 %1171
        %v1174 = vsel %vm994, %v1169, 0
        %v1177 = vsel %vm1058, %v1172, 0
        %1179 = vmatprep.subr.bf16.mxu0 0
        %1180 = vmatpush1.bf16.msra.mxu0 %v1177
        %1181 = vmatprep.subr.bf16.mxu0 0
        %1182 = vmatpush1.bf16.msra.mxu0 0
        %1183 = vmatprep.subr.bf16.mxu0 0
        %1184 = vmatpush1.bf16.msra.mxu0 0
        %1185 = vmatprep.subr.bf16.mxu0 0
        %1186 = vmatpush1.bf16.msra.mxu0 0
        %1187 = vmatprep.subr.bf16.mxu0 0
        %1188 = vmatpush1.bf16.msra.mxu0 0
        %1189 = vmatprep.subr.bf16.mxu0 0
        %1190 = vmatpush1.bf16.msra.mxu0 0
        %1191 = vmatprep.subr.bf16.mxu0 0
        %1192 = vmatpush1.bf16.msra.mxu0 0
        %1193 = vmatprep.subr.bf16.mxu0 0
        %1194 = vmatpush1.bf16.msra.mxu0 0
        %1195 = vmatprep.subr.bf16.mxu0 0
        %1196 = vmatpush1.bf16.msra.mxu0 0
        %1197 = vmatprep.subr.bf16.mxu0 0
        %1198 = vmatpush1.bf16.msra.mxu0 0
        %1199 = vmatprep.subr.bf16.mxu0 0
        %1200 = vmatpush1.bf16.msra.mxu0 0
        %1201 = vmatprep.subr.bf16.mxu0 0
        %1202 = vmatpush1.bf16.msra.mxu0 0
        %1203 = vmatprep.subr.bf16.mxu0 0
        %1204 = vmatpush1.bf16.msra.mxu0 0
        %1205 = vmatprep.subr.bf16.mxu0 0
        %1206 = vmatpush1.bf16.msra.mxu0 0
        %1207 = vmatprep.subr.bf16.mxu0 0
        %1208 = vmatpush1.bf16.msra.mxu0 0
        %1209 = vmatprep.subr.bf16.mxu0 0
        %1210 = vmatpush1.bf16.msra.mxu0 0
        %1211 = vmatprep.mubr.bf16.mxu0 0
        %1212 = vmatmul.mubr.bf16.gmra.mrb[0].mxu0 %v1174
        %v1213 = vpop.f32.mrb[0].mxu0
        %v1214 = vadd.f32 0.0, %v1213
        %v1215 = vpop.f32.mrb[0].mxu0
        %v1216 = vpop.f32.mrb[0].mxu0
        %v1217 = vpop.f32.mrb[0].mxu0
        %1218 = vdwg.mxu0
        %v1219 = vpack.c.bf16 %v1214, %v1214
        %s1220 = scalar_lea.vmem %s10, 4
        %v1221 = vld [vmem:[%s1220] sm:$0xf]
        %v1223 = vsel %vm994, %v1219, 0
        %v1226 = vsel %vm1058, %v1221, 0
        %1228 = vmatprep.subr.bf16.mxu0 0
        %1229 = vmatpush1.bf16.msra.mxu0 %v1226
        %1230 = vmatprep.subr.bf16.mxu0 0
        %1231 = vmatpush1.bf16.msra.mxu0 0
        %1232 = vmatprep.subr.bf16.mxu0 0
        %1233 = vmatpush1.bf16.msra.mxu0 0
        %1234 = vmatprep.subr.bf16.mxu0 0
        %1235 = vmatpush1.bf16.msra.mxu0 0
        %1236 = vmatprep.subr.bf16.mxu0 0
        %1237 = vmatpush1.bf16.msra.mxu0 0
        %1238 = vmatprep.subr.bf16.mxu0 0
        %1239 = vmatpush1.bf16.msra.mxu0 0
        %1240 = vmatprep.subr.bf16.mxu0 0
        %1241 = vmatpush1.bf16.msra.mxu0 0
        %1242 = vmatprep.subr.bf16.mxu0 0
        %1243 = vmatpush1.bf16.msra.mxu0 0
        %1244 = vmatprep.subr.bf16.mxu0 0
        %1245 = vmatpush1.bf16.msra.mxu0 0
        %1246 = vmatprep.subr.bf16.mxu0 0
        %1247 = vmatpush1.bf16.msra.mxu0 0
        %1248 = vmatprep.subr.bf16.mxu0 0
        %1249 = vmatpush1.bf16.msra.mxu0 0
        %1250 = vmatprep.subr.bf16.mxu0 0
        %1251 = vmatpush1.bf16.msra.mxu0 0
        %1252 = vmatprep.subr.bf16.mxu0 0
        %1253 = vmatpush1.bf16.msra.mxu0 0
        %1254 = vmatprep.subr.bf16.mxu0 0
        %1255 = vmatpush1.bf16.msra.mxu0 0
        %1256 = vmatprep.subr.bf16.mxu0 0
        %1257 = vmatpush1.bf16.msra.mxu0 0
        %1258 = vmatprep.subr.bf16.mxu0 0
        %1259 = vmatpush1.bf16.msra.mxu0 0
        %1260 = vmatprep.mubr.bf16.mxu0 0
        %1261 = vmatmul.mubr.bf16.gmra.mrb[0].mxu0 %v1223
        %v1262 = vpop.f32.mrb[0].mxu0
        %v1263 = vadd.f32 0.0, %v1262
        %v1264 = vpop.f32.mrb[0].mxu0
        %v1265 = vpop.f32.mrb[0].mxu0
        %v1266 = vpop.f32.mrb[0].mxu0
        %1267 = vdwg.mxu0
        %v1269 = vsel %vm994, %v1102, 0
        %v1272 = vsel %vm1058, %v1103, 0
        %1274 = vmatprep.subr.bf16.mxu0 0
        %1275 = vmatpush1.bf16.msra.mxu0 %v1272
        %1276 = vmatprep.subr.bf16.mxu0 0
        %1277 = vmatpush1.bf16.msra.mxu0 0
        %1278 = vmatprep.subr.bf16.mxu0 0
        %1279 = vmatpush1.bf16.msra.mxu0 0
        %1280 = vmatprep.subr.bf16.mxu0 0
        %1281 = vmatpush1.bf16.msra.mxu0 0
        %1282 = vmatprep.subr.bf16.mxu0 0
        %1283 = vmatpush1.bf16.msra.mxu0 0
        %1284 = vmatprep.subr.bf16.mxu0 0
        %1285 = vmatpush1.bf16.msra.mxu0 0
        %1286 = vmatprep.subr.bf16.mxu0 0
        %1287 = vmatpush1.bf16.msra.mxu0 0
        %1288 = vmatprep.subr.bf16.mxu0 0
        %1289 = vmatpush1.bf16.msra.mxu0 0
        %1290 = vmatprep.subr.bf16.mxu0 0
        %1291 = vmatpush1.bf16.msra.mxu0 0
        %1292 = vmatprep.subr.bf16.mxu0 0
        %1293 = vmatpush1.bf16.msra.mxu0 0
        %1294 = vmatprep.subr.bf16.mxu0 0
        %1295 = vmatpush1.bf16.msra.mxu0 0
        %1296 = vmatprep.subr.bf16.mxu0 0
        %1297 = vmatpush1.bf16.msra.mxu0 0
        %1298 = vmatprep.subr.bf16.mxu0 0
        %1299 = vmatpush1.bf16.msra.mxu0 0
        %1300 = vmatprep.subr.bf16.mxu0 0
        %1301 = vmatpush1.bf16.msra.mxu0 0
        %1302 = vmatprep.subr.bf16.mxu0 0
        %1303 = vmatpush1.bf16.msra.mxu0 0
        %1304 = vmatprep.subr.bf16.mxu0 0
        %1305 = vmatpush1.bf16.msra.mxu0 0
        %1306 = vmatprep.mubr.bf16.mxu0 0
        %1307 = vmatmul.mubr.bf16.gmra.mrb[0].mxu0 %v1269
        %v1308 = vpop.f32.mrb[0].mxu0
        %v1309 = vadd.f32 %v1263, %v1308
        %v1310 = vpop.f32.mrb[0].mxu0
        %v1311 = vpop.f32.mrb[0].mxu0
        %v1312 = vpop.f32.mrb[0].mxu0
        %1313 = vdwg.mxu0
        %1314 = vrot.lane.b32.xlu0 %v862, 112
        %v1315 = vpop.permute.xlu0 %1314
        %1316 = vrot.lane.b32.xlu0 %v929, 112
        %v1317 = vpop.permute.xlu0 %1316
        %v1319 = vsel %vm994, %v1315, 0
        %v1322 = vsel %vm994, %v1317, 0
        %1324 = vmatprep.subr.bf16.mxu0 0
        %1325 = vmatpush1.bf16.xpose.msra.mxu0 %v1322
        %1326 = vmatprep.subr.bf16.mxu0 0
        %1327 = vmatpush1.bf16.xpose.msra.mxu0 0
        %1328 = vmatprep.subr.bf16.mxu0 0
        %1329 = vmatpush1.bf16.xpose.msra.mxu0 0
        %1330 = vmatprep.subr.bf16.mxu0 0
        %1331 = vmatpush1.bf16.xpose.msra.mxu0 0
        %1332 = vmatprep.subr.bf16.mxu0 0
        %1333 = vmatpush1.bf16.xpose.msra.mxu0 0
        %1334 = vmatprep.subr.bf16.mxu0 0
        %1335 = vmatpush1.bf16.xpose.msra.mxu0 0
        %1336 = vmatprep.subr.bf16.mxu0 0
        %1337 = vmatpush1.bf16.xpose.msra.mxu0 0
        %1338 = vmatprep.subr.bf16.mxu0 0
        %1339 = vmatpush1.bf16.xpose.msra.mxu0 0
        %1340 = vmatprep.subr.bf16.mxu0 0
        %1341 = vmatpush1.bf16.xpose.msra.mxu0 0
        %1342 = vmatprep.subr.bf16.mxu0 0
        %1343 = vmatpush1.bf16.xpose.msra.mxu0 0
        %1344 = vmatprep.subr.bf16.mxu0 0
        %1345 = vmatpush1.bf16.xpose.msra.mxu0 0
        %1346 = vmatprep.subr.bf16.mxu0 0
        %1347 = vmatpush1.bf16.xpose.msra.mxu0 0
        %1348 = vmatprep.subr.bf16.mxu0 0
        %1349 = vmatpush1.bf16.xpose.msra.mxu0 0
        %1350 = vmatprep.subr.bf16.mxu0 0
        %1351 = vmatpush1.bf16.xpose.msra.mxu0 0
        %1352 = vmatprep.subr.bf16.mxu0 0
        %1353 = vmatpush1.bf16.xpose.msra.mxu0 0
        %1354 = vmatprep.subr.bf16.mxu0 0
        %1355 = vmatpush1.bf16.xpose.msra.mxu0 0
        %1356 = vmatprep.mubr.bf16.mxu0 0
        %1357 = vmatmul.mubr.bf16.gmra.mrb[0].mxu0 %v1319
        %v1358 = vpop.f32.mrb[0].mxu0
        %v1359 = vadd.f32 0.0, %v1358
        %v1360 = vpop.f32.mrb[0].mxu0
        %v1361 = vpop.f32.mrb[0].mxu0
        %v1362 = vpop.f32.mrb[0].mxu0
        %1363 = vdwg.mxu0
        %v1364 = vmul.f32 %v1359, 0.35355338
        %v1365 = vadd.f32 %v1364, %v733
        %v1366 = vsel %vm994, %v1365, -inf
        %1367 = vmax.xlane.f32.xlu0 %v1366
        %v1368 = vpop.xlane.xlu0 %1367
        %v1369 = vsub.f32 %v1365, %v1368
        %v1370 = vmul.f32 %v1369, 1.442695
        %v1371 = vpow.pop %v1370
        %v1372 = vsel %vm994, %v1371, 0.0
        %1373 = vadd.xlane.f32.xlu0 %v1372
        %v1374 = vpop.xlane.xlu0 %1373
        %v1375 = vrcp.pop %v1374
        %v1376 = vmul.f32 %v1371, %v1375
        %v1377 = vpack.c.bf16 %v1376, %v1376
        %1378 = vrot.lane.b32.xlu0 %v993, 112
        %v1379 = vpop.permute.xlu0 %1378
        %v1381 = vsel %vm994, %v1377, 0
        %v1384 = vsel %vm1058, %v1379, 0
        %1386 = vmatprep.subr.bf16.mxu0 0
        %1387 = vmatpush1.bf16.msra.mxu0 %v1384
        %1388 = vmatprep.subr.bf16.mxu0 0
        %1389 = vmatpush1.bf16.msra.mxu0 0
        %1390 = vmatprep.subr.bf16.mxu0 0
        %1391 = vmatpush1.bf16.msra.mxu0 0
        %1392 = vmatprep.subr.bf16.mxu0 0
        %1393 = vmatpush1.bf16.msra.mxu0 0
        %1394 = vmatprep.subr.bf16.mxu0 0
        %1395 = vmatpush1.bf16.msra.mxu0 0
        %1396 = vmatprep.subr.bf16.mxu0 0
        %1397 = vmatpush1.bf16.msra.mxu0 0
        %1398 = vmatprep.subr.bf16.mxu0 0
        %1399 = vmatpush1.bf16.msra.mxu0 0
        %1400 = vmatprep.subr.bf16.mxu0 0
        %1401 = vmatpush1.bf16.msra.mxu0 0
        %1402 = vmatprep.subr.bf16.mxu0 0
        %1403 = vmatpush1.bf16.msra.mxu0 0
        %1404 = vmatprep.subr.bf16.mxu0 0
        %1405 = vmatpush1.bf16.msra.mxu0 0
        %1406 = vmatprep.subr.bf16.mxu0 0
        %1407 = vmatpush1.bf16.msra.mxu0 0
        %1408 = vmatprep.subr.bf16.mxu0 0
        %1409 = vmatpush1.bf16.msra.mxu0 0
        %1410 = vmatprep.subr.bf16.mxu0 0
        %1411 = vmatpush1.bf16.msra.mxu0 0
        %1412 = vmatprep.subr.bf16.mxu0 0
        %1413 = vmatpush1.bf16.msra.mxu0 0
        %1414 = vmatprep.subr.bf16.mxu0 0
        %1415 = vmatpush1.bf16.msra.mxu0 0
        %1416 = vmatprep.subr.bf16.mxu0 0
        %1417 = vmatpush1.bf16.msra.mxu0 0
        %1418 = vmatprep.mubr.bf16.mxu0 0
        %1419 = vmatmul.mubr.bf16.gmra.mrb[0].mxu0 %v1381
        %v1420 = vpop.f32.mrb[0].mxu0
        %v1421 = vadd.f32 0.0, %v1420
        %v1422 = vpop.f32.mrb[0].mxu0
        %v1423 = vpop.f32.mrb[0].mxu0
        %v1424 = vpop.f32.mrb[0].mxu0
        %1425 = vdwg.mxu0
        %v1426 = vpack.c.bf16 %v1421, %v1421
        %s1427 = scalar_lea.vmem %s10, 8
        %v1428 = vld [vmem:[%s1427] sm:$0xf]
        %v1430 = vsel %vm994, %v1426, 0
        %v1433 = vsel %vm1058, %v1428, 0
        %1435 = vmatprep.subr.bf16.mxu0 0
        %1436 = vmatpush1.bf16.msra.mxu0 %v1433
        %1437 = vmatprep.subr.bf16.mxu0 0
        %1438 = vmatpush1.bf16.msra.mxu0 0
        %1439 = vmatprep.subr.bf16.mxu0 0
        %1440 = vmatpush1.bf16.msra.mxu0 0
        %1441 = vmatprep.subr.bf16.mxu0 0
        %1442 = vmatpush1.bf16.msra.mxu0 0
        %1443 = vmatprep.subr.bf16.mxu0 0
        %1444 = vmatpush1.bf16.msra.mxu0 0
        %1445 = vmatprep.subr.bf16.mxu0 0
        %1446 = vmatpush1.bf16.msra.mxu0 0
        %1447 = vmatprep.subr.bf16.mxu0 0
        %1448 = vmatpush1.bf16.msra.mxu0 0
        %1449 = vmatprep.subr.bf16.mxu0 0
        %1450 = vmatpush1.bf16.msra.mxu0 0
        %1451 = vmatprep.subr.bf16.mxu0 0
        %1452 = vmatpush1.bf16.msra.mxu0 0
        %1453 = vmatprep.subr.bf16.mxu0 0
        %1454 = vmatpush1.bf16.msra.mxu0 0
        %1455 = vmatprep.subr.bf16.mxu0 0
        %1456 = vmatpush1.bf16.msra.mxu0 0
        %1457 = vmatprep.subr.bf16.mxu0 0
        %1458 = vmatpush1.bf16.msra.mxu0 0
        %1459 = vmatprep.subr.bf16.mxu0 0
        %1460 = vmatpush1.bf16.msra.mxu0 0
        %1461 = vmatprep.subr.bf16.mxu0 0
        %1462 = vmatpush1.bf16.msra.mxu0 0
        %1463 = vmatprep.subr.bf16.mxu0 0
        %1464 = vmatpush1.bf16.msra.mxu0 0
        %1465 = vmatprep.subr.bf16.mxu0 0
        %1466 = vmatpush1.bf16.msra.mxu0 0
        %1467 = vmatprep.mubr.bf16.mxu0 0
        %1468 = vmatmul.mubr.bf16.gmra.mrb[0].mxu0 %v1430
        %v1469 = vpop.f32.mrb[0].mxu0
        %v1470 = vadd.f32 0.0, %v1469
        %v1471 = vpop.f32.mrb[0].mxu0
        %v1472 = vpop.f32.mrb[0].mxu0
        %v1473 = vpop.f32.mrb[0].mxu0
        %1474 = vdwg.mxu0
        %v1475 = vadd.f32 %v1309, %v1470
        %1476 = vrot.lane.b32.xlu0 %v862, 104
        %v1477 = vpop.permute.xlu0 %1476
        %1478 = vrot.lane.b32.xlu0 %v929, 104
        %v1479 = vpop.permute.xlu0 %1478
        %v1481 = vsel %vm994, %v1477, 0
        %v1484 = vsel %vm994, %v1479, 0
        %1486 = vmatprep.subr.bf16.mxu0 0
        %1487 = vmatpush1.bf16.xpose.msra.mxu0 %v1484
        %1488 = vmatprep.subr.bf16.mxu0 0
        %1489 = vmatpush1.bf16.xpose.msra.mxu0 0
        %1490 = vmatprep.subr.bf16.mxu0 0
        %1491 = vmatpush1.bf16.xpose.msra.mxu0 0
        %1492 = vmatprep.subr.bf16.mxu0 0
        %1493 = vmatpush1.bf16.xpose.msra.mxu0 0
        %1494 = vmatprep.subr.bf16.mxu0 0
        %1495 = vmatpush1.bf16.xpose.msra.mxu0 0
        %1496 = vmatprep.subr.bf16.mxu0 0
        %1497 = vmatpush1.bf16.xpose.msra.mxu0 0
        %1498 = vmatprep.subr.bf16.mxu0 0
        %1499 = vmatpush1.bf16.xpose.msra.mxu0 0
        %1500 = vmatprep.subr.bf16.mxu0 0
        %1501 = vmatpush1.bf16.xpose.msra.mxu0 0
        %1502 = vmatprep.subr.bf16.mxu0 0
        %1503 = vmatpush1.bf16.xpose.msra.mxu0 0
        %1504 = vmatprep.subr.bf16.mxu0 0
        %1505 = vmatpush1.bf16.xpose.msra.mxu0 0
        %1506 = vmatprep.subr.bf16.mxu0 0
        %1507 = vmatpush1.bf16.xpose.msra.mxu0 0
        %1508 = vmatprep.subr.bf16.mxu0 0
        %1509 = vmatpush1.bf16.xpose.msra.mxu0 0
        %1510 = vmatprep.subr.bf16.mxu0 0
        %1511 = vmatpush1.bf16.xpose.msra.mxu0 0
        %1512 = vmatprep.subr.bf16.mxu0 0
        %1513 = vmatpush1.bf16.xpose.msra.mxu0 0
        %1514 = vmatprep.subr.bf16.mxu0 0
        %1515 = vmatpush1.bf16.xpose.msra.mxu0 0
        %1516 = vmatprep.subr.bf16.mxu0 0
        %1517 = vmatpush1.bf16.xpose.msra.mxu0 0
        %1518 = vmatprep.mubr.bf16.mxu0 0
        %1519 = vmatmul.mubr.bf16.gmra.mrb[0].mxu0 %v1481
        %v1520 = vpop.f32.mrb[0].mxu0
        %v1521 = vadd.f32 0.0, %v1520
        %v1522 = vpop.f32.mrb[0].mxu0
        %v1523 = vpop.f32.mrb[0].mxu0
        %v1524 = vpop.f32.mrb[0].mxu0
        %1525 = vdwg.mxu0
        %v1526 = vmul.f32 %v1521, 0.35355338
        %v1527 = vadd.f32 %v1526, %v733
        %v1528 = vsel %vm994, %v1527, -inf
        %1529 = vmax.xlane.f32.xlu0 %v1528
        %v1530 = vpop.xlane.xlu0 %1529
        %v1531 = vsub.f32 %v1527, %v1530
        %v1532 = vmul.f32 %v1531, 1.442695
        %v1533 = vpow.pop %v1532
        %v1534 = vsel %vm994, %v1533, 0.0
        %1535 = vadd.xlane.f32.xlu0 %v1534
        %v1536 = vpop.xlane.xlu0 %1535
        %v1537 = vrcp.pop %v1536
        %v1538 = vmul.f32 %v1533, %v1537
        %v1539 = vpack.c.bf16 %v1538, %v1538
        %1540 = vrot.lane.b32.xlu0 %v993, 104
        %v1541 = vpop.permute.xlu0 %1540
        %v1543 = vsel %vm994, %v1539, 0
        %v1546 = vsel %vm1058, %v1541, 0
        %1548 = vmatprep.subr.bf16.mxu0 0
        %1549 = vmatpush1.bf16.msra.mxu0 %v1546
        %1550 = vmatprep.subr.bf16.mxu0 0
        %1551 = vmatpush1.bf16.msra.mxu0 0
        %1552 = vmatprep.subr.bf16.mxu0 0
        %1553 = vmatpush1.bf16.msra.mxu0 0
        %1554 = vmatprep.subr.bf16.mxu0 0
        %1555 = vmatpush1.bf16.msra.mxu0 0
        %1556 = vmatprep.subr.bf16.mxu0 0
        %1557 = vmatpush1.bf16.msra.mxu0 0
        %1558 = vmatprep.subr.bf16.mxu0 0
        %1559 = vmatpush1.bf16.msra.mxu0 0
        %1560 = vmatprep.subr.bf16.mxu0 0
        %1561 = vmatpush1.bf16.msra.mxu0 0
        %1562 = vmatprep.subr.bf16.mxu0 0
        %1563 = vmatpush1.bf16.msra.mxu0 0
        %1564 = vmatprep.subr.bf16.mxu0 0
        %1565 = vmatpush1.bf16.msra.mxu0 0
        %1566 = vmatprep.subr.bf16.mxu0 0
        %1567 = vmatpush1.bf16.msra.mxu0 0
        %1568 = vmatprep.subr.bf16.mxu0 0
        %1569 = vmatpush1.bf16.msra.mxu0 0
        %1570 = vmatprep.subr.bf16.mxu0 0
        %1571 = vmatpush1.bf16.msra.mxu0 0
        %1572 = vmatprep.subr.bf16.mxu0 0
        %1573 = vmatpush1.bf16.msra.mxu0 0
        %1574 = vmatprep.subr.bf16.mxu0 0
        %1575 = vmatpush1.bf16.msra.mxu0 0
        %1576 = vmatprep.subr.bf16.mxu0 0
        %1577 = vmatpush1.bf16.msra.mxu0 0
        %1578 = vmatprep.subr.bf16.mxu0 0
        %1579 = vmatpush1.bf16.msra.mxu0 0
        %1580 = vmatprep.mubr.bf16.mxu0 0
        %1581 = vmatmul.mubr.bf16.gmra.mrb[0].mxu0 %v1543
        %v1582 = vpop.f32.mrb[0].mxu0
        %v1583 = vadd.f32 0.0, %v1582
        %v1584 = vpop.f32.mrb[0].mxu0
        %v1585 = vpop.f32.mrb[0].mxu0
        %v1586 = vpop.f32.mrb[0].mxu0
        %1587 = vdwg.mxu0
        %v1588 = vpack.c.bf16 %v1583, %v1583
        %s1589 = scalar_lea.vmem %s10, 12
        %v1590 = vld [vmem:[%s1589] sm:$0xf]
        %v1592 = vsel %vm994, %v1588, 0
        %v1595 = vsel %vm1058, %v1590, 0
        %1597 = vmatprep.subr.bf16.mxu0 0
        %1598 = vmatpush1.bf16.msra.mxu0 %v1595
        %1599 = vmatprep.subr.bf16.mxu0 0
        %1600 = vmatpush1.bf16.msra.mxu0 0
        %1601 = vmatprep.subr.bf16.mxu0 0
        %1602 = vmatpush1.bf16.msra.mxu0 0
        %1603 = vmatprep.subr.bf16.mxu0 0
        %1604 = vmatpush1.bf16.msra.mxu0 0
        %1605 = vmatprep.subr.bf16.mxu0 0
        %1606 = vmatpush1.bf16.msra.mxu0 0
        %1607 = vmatprep.subr.bf16.mxu0 0
        %1608 = vmatpush1.bf16.msra.mxu0 0
        %1609 = vmatprep.subr.bf16.mxu0 0
        %1610 = vmatpush1.bf16.msra.mxu0 0
        %1611 = vmatprep.subr.bf16.mxu0 0
        %1612 = vmatpush1.bf16.msra.mxu0 0
        %1613 = vmatprep.subr.bf16.mxu0 0
        %1614 = vmatpush1.bf16.msra.mxu0 0
        %1615 = vmatprep.subr.bf16.mxu0 0
        %1616 = vmatpush1.bf16.msra.mxu0 0
        %1617 = vmatprep.subr.bf16.mxu0 0
        %1618 = vmatpush1.bf16.msra.mxu0 0
        %1619 = vmatprep.subr.bf16.mxu0 0
        %1620 = vmatpush1.bf16.msra.mxu0 0
        %1621 = vmatprep.subr.bf16.mxu0 0
        %1622 = vmatpush1.bf16.msra.mxu0 0
        %1623 = vmatprep.subr.bf16.mxu0 0
        %1624 = vmatpush1.bf16.msra.mxu0 0
        %1625 = vmatprep.subr.bf16.mxu0 0
        %1626 = vmatpush1.bf16.msra.mxu0 0
        %1627 = vmatprep.subr.bf16.mxu0 0
        %1628 = vmatpush1.bf16.msra.mxu0 0
        %1629 = vmatprep.mubr.bf16.mxu0 0
        %1630 = vmatmul.mubr.bf16.gmra.mrb[0].mxu0 %v1592
        %v1631 = vpop.f32.mrb[0].mxu0
        %v1632 = vadd.f32 0.0, %v1631
        %v1633 = vpop.f32.mrb[0].mxu0
        %v1634 = vpop.f32.mrb[0].mxu0
        %v1635 = vpop.f32.mrb[0].mxu0
        %1636 = vdwg.mxu0
        %v1637 = vadd.f32 %v1475, %v1632
        %v1638 = vadd.f32 %v731, %v1637
        %v1639 = vld [vmem:[#allocation13] sm:$0x1]
        %v1641 = vlaneseq
        %v1642 = vshrl.u32 %v1641, 7
        %v1643 = vsub.s32 0, %v1642
        %v1644 = vrot.slane %v1639, %v1643
        %v1646 = vadd.f32 %v1638, %v1644
        %v1647 = vsel %vm734, %v1646, 0.0
        %1648 = vadd.xlane.f32.xlu0 %v1647
        %v1649 = vpop.xlane.xlu0 %1648
        %v1650 = vmul.f32 %v1649, %v738
        %v1651 = vsub.f32 %v1646, %v1650
        %v1652 = vmul.f32 %v1651, %v1651
        %v1653 = vsel %vm734, %v1652, 0.0
        %1654 = vadd.xlane.f32.xlu0 %v1653
        %v1655 = vpop.xlane.xlu0 %1654
        %v1656 = vmul.f32 %v1655, 0.032258064
        %v1657 = vrsqrt.pop %v1656
        %v1658 = vmul.f32 %v1656, %v1657
        %vm1659 = vcmp.eq.f32.partialorder %v1656, inf
        %v1660 = vsel %vm1659, %v1656, %v1658
        %vm1661 = vcmp.eq.f32.partialorder %v1656, 0.0
        %v1662 = vand.u32 %v1656, 2147483648
        %v1663 = vsel %vm1661, %v1662, %v1660
        %v1664 = vadd.f32 %v1663, 1e-06
        %v1665 = vrcp.pop %v1664
        %v1666 = vld [vmem:[#allocation14] sm:$0x1]
        %v1668 = vlaneseq
        %v1669 = vshrl.u32 %v1668, 7
        %v1670 = vsub.s32 0, %v1669
        %v1671 = vrot.slane %v1666, %v1670
        %v1673 = vmul.f32 %v1671, %v1651
        %v1674 = vmul.f32 %v1673, %v1665
        %v1675 = vld [vmem:[#allocation16] sm:$0x1]
        %v1677 = vlaneseq
        %v1678 = vshrl.u32 %v1677, 7
        %v1679 = vsub.s32 0, %v1678
        %v1680 = vrot.slane %v1675, %v1679
        %v1682 = vadd.f32 %v1674, %v1680
        %v1683 = vpack.c.bf16 %v1682, %v1682
        %v1684 = vld [vmem:[%s14] sm:$0xf]
        %v1685 = vld [vmem:[%s14 + $0x4] sm:$0xf]
        %v1686 = vld [vmem:[%s14 + $0x8] sm:$0xf]
        %v1687 = vld [vmem:[%s14 + $0xc] sm:$0xf]
        %v1688 = vld [vmem:[%s15] sm:$0x1]
        %v1690 = vlaneseq
        %v1691 = vshrl.u32 %v1690, 7
        %v1692 = vsub.s32 0, %v1691
        %v1693 = vrot.slane %v1688, %v1692
        %v1699 = vunpack.c.l.b16 %v1684
        %v1700 = vunpack.c.l.b16 %v1685
        %v1701 = vunpack.c.l.b16 %v1686
        %v1702 = vunpack.c.l.b16 %v1687
        %v1703 = vpack.c.b16 %v1700, %v1699
        %v1704 = vpack.c.b16 %v1702, %v1701
        %v1708 = vsel %vm734, %v1683, 0
        %1710 = vmatprep.subr.bf16.mxu0 0
        %1711 = vmatpush1.bf16.msra.mxu0 %v1703
        %1712 = vmatprep.subr.bf16.mxu0 0
        %1713 = vmatpush1.bf16.msra.mxu0 %v1704
        %1714 = vmatprep.subr.bf16.mxu0 0
        %1715 = vmatpush1.bf16.msra.mxu0 0
        %1716 = vmatprep.subr.bf16.mxu0 0
        %1717 = vmatpush1.bf16.msra.mxu0 0
        %1718 = vmatprep.subr.bf16.mxu0 0
        %1719 = vmatpush1.bf16.msra.mxu0 0
        %1720 = vmatprep.subr.bf16.mxu0 0
        %1721 = vmatpush1.bf16.msra.mxu0 0
        %1722 = vmatprep.subr.bf16.mxu0 0
        %1723 = vmatpush1.bf16.msra.mxu0 0
        %1724 = vmatprep.subr.bf16.mxu0 0
        %1725 = vmatpush1.bf16.msra.mxu0 0
        %1726 = vmatprep.subr.bf16.mxu0 0
        %1727 = vmatpush1.bf16.msra.mxu0 0
        %1728 = vmatprep.subr.bf16.mxu0 0
        %1729 = vmatpush1.bf16.msra.mxu0 0
        %1730 = vmatprep.subr.bf16.mxu0 0
        %1731 = vmatpush1.bf16.msra.mxu0 0
        %1732 = vmatprep.subr.bf16.mxu0 0
        %1733 = vmatpush1.bf16.msra.mxu0 0
        %1734 = vmatprep.subr.bf16.mxu0 0
        %1735 = vmatpush1.bf16.msra.mxu0 0
        %1736 = vmatprep.subr.bf16.mxu0 0
        %1737 = vmatpush1.bf16.msra.mxu0 0
        %1738 = vmatprep.subr.bf16.mxu0 0
        %1739 = vmatpush1.bf16.msra.mxu0 0
        %1740 = vmatprep.subr.bf16.mxu0 0
        %1741 = vmatpush1.bf16.msra.mxu0 0
        %1742 = vmatprep.mubr.bf16.mxu0 0
        %1743 = vmatmul.mubr.bf16.gmra.mrb[0].mxu0 %v1708
        %v1744 = vpop.f32.mrb[0].mxu0
        %v1745 = vadd.f32 %v1693, %v1744
        %v1746 = vpop.f32.mrb[0].mxu0
        %v1747 = vpop.f32.mrb[0].mxu0
        %v1748 = vpop.f32.mrb[0].mxu0
        %1749 = vdwg.mxu0
        %v1750 = vmax.f32 %v1745, 0.0
        %v1751 = vpack.c.bf16 %v1750, %v1750
        %v1752 = vld [vmem:[%s16] sm:$0xf]
        %v1753 = vld [vmem:[%s16 + $0x4] sm:$0xf]
        %v1754 = vld [vmem:[%s16 + $0x8] sm:$0xf]
        %v1755 = vld [vmem:[%s16 + $0xc] sm:$0xf]
        %v1756 = vld [vmem:[%s16 + $0x10] sm:$0xf]
        %v1757 = vld [vmem:[%s16 + $0x14] sm:$0xf]
        %v1758 = vld [vmem:[%s16 + $0x18] sm:$0xf]
        %v1759 = vld [vmem:[%s16 + $0x1c] sm:$0xf]
        %v1760 = vld [vmem:[%s17] sm:$0x1]
        %v1762 = vlaneseq
        %v1763 = vshrl.u32 %v1762, 7
        %v1764 = vsub.s32 0, %v1763
        %v1765 = vrot.slane %v1760, %v1764
        %v1775 = vunpack.c.l.b16 %v1752
        %v1776 = vunpack.c.l.b16 %v1753
        %v1777 = vunpack.c.l.b16 %v1754
        %v1778 = vunpack.c.l.b16 %v1755
        %v1779 = vunpack.c.l.b16 %v1756
        %v1780 = vunpack.c.l.b16 %v1757
        %v1781 = vunpack.c.l.b16 %v1758
        %v1782 = vunpack.c.l.b16 %v1759
        %v1783 = vpack.c.b16 %v1776, %v1775
        %v1784 = vpack.c.b16 %v1778, %v1777
        %v1785 = vpack.c.b16 %v1780, %v1779
        %v1786 = vpack.c.b16 %v1782, %v1781
        %vm1791 = vcmask 523264
        %v1793 = vsel %vm1791, %v1751, 0
        %1795 = vmatprep.subr.bf16.mxu0 0
        %1796 = vmatpush1.bf16.msra.mxu0 %v1783
        %1797 = vmatprep.subr.bf16.mxu0 0
        %1798 = vmatpush1.bf16.msra.mxu0 %v1784
        %1799 = vmatprep.subr.bf16.mxu0 0
        %1800 = vmatpush1.bf16.msra.mxu0 %v1785
        %1801 = vmatprep.subr.bf16.mxu0 0
        %1802 = vmatpush1.bf16.msra.mxu0 %v1786
        %1803 = vmatprep.subr.bf16.mxu0 0
        %1804 = vmatpush1.bf16.msra.mxu0 0
        %1805 = vmatprep.subr.bf16.mxu0 0
        %1806 = vmatpush1.bf16.msra.mxu0 0
        %1807 = vmatprep.subr.bf16.mxu0 0
        %1808 = vmatpush1.bf16.msra.mxu0 0
        %1809 = vmatprep.subr.bf16.mxu0 0
        %1810 = vmatpush1.bf16.msra.mxu0 0
        %1811 = vmatprep.subr.bf16.mxu0 0
        %1812 = vmatpush1.bf16.msra.mxu0 0
        %1813 = vmatprep.subr.bf16.mxu0 0
        %1814 = vmatpush1.bf16.msra.mxu0 0
        %1815 = vmatprep.subr.bf16.mxu0 0
        %1816 = vmatpush1.bf16.msra.mxu0 0
        %1817 = vmatprep.subr.bf16.mxu0 0
        %1818 = vmatpush1.bf16.msra.mxu0 0
        %1819 = vmatprep.subr.bf16.mxu0 0
        %1820 = vmatpush1.bf16.msra.mxu0 0
        %1821 = vmatprep.subr.bf16.mxu0 0
        %1822 = vmatpush1.bf16.msra.mxu0 0
        %1823 = vmatprep.subr.bf16.mxu0 0
        %1824 = vmatpush1.bf16.msra.mxu0 0
        %1825 = vmatprep.subr.bf16.mxu0 0
        %1826 = vmatpush1.bf16.msra.mxu0 0
        %1827 = vmatprep.mubr.bf16.mxu0 0
        %1828 = vmatmul.mubr.bf16.gmra.mrb[0].mxu0 %v1793
        %v1829 = vpop.f32.mrb[0].mxu0
        %v1830 = vadd.f32 %v1765, %v1829
        %v1831 = vpop.f32.mrb[0].mxu0
        %v1832 = vpop.f32.mrb[0].mxu0
        %v1833 = vpop.f32.mrb[0].mxu0
        %1834 = vdwg.mxu0
        %v1835 = vadd.f32 %v1646, %v1830
        %1836 = vst.msk [vmem:[%s722] sm:$0xff] %vm734, %v1835
        %s1837 = sand.u32 %s451, 1
        %s1838 = scalar_lea.sflag [#allocation4], %s1837
        %s1839 = sand.u32 %s451, 1
        %s1840 = smul.addr %s1839, 8
        %s1841 = scalar_lea.vmem [#allocation17], %s1840
        // Predicated region
        $region129: #{tpu_custom_call.1} parent=91 // pred_check
          %p1842 = pneg %p461
        $region130: #{tpu_custom_call.1} parent=91 // pred_check_branch
          %1844 = sbr.rel (%p1842) target = $region132
        $region131: #{tpu_custom_call.1} parent=91 // pred_region
          %s1846 = ssub.s32 128, 128
          %1847 = vsyncadd %s1838, %s1846
          %s1848 = sadd.s32 %s44, %s43
          %s1849 = smul.addr %s1848, 128
          %s1850 = scalar_lea.hbm %s18, %s1849
          %s1852 = sshll.u32 %s1841, 4
          %s1853 = int_to_ptr.vmem [resolvable:$true] %s1852
          %1855 = dma.vmem_to_hbm [thread:$0]  %s1853, 128, %s1850, %s1838
        $region132: #{tpu_custom_call.1} parent=91 // pred_fallthru
          _
      $region92: #{tpu_custom_call.1} parent=5 // pred_fallthru
        _
      %p1856 = scmp.le.s32.totalorder 2, %s34
      // Predicated region
      $region133: #{tpu_custom_call.1} parent=5 // pred_check
        %p1857 = pneg %p1856
      $region134: #{tpu_custom_call.1} parent=5 // pred_check_branch
        %1859 = sbr.rel (%p1857) target = $region136
      $region135: #{tpu_custom_call.1} parent=5 // pred_region
        %s1860 = ssub.s32 %s34, 2
        // Predicated region
        $region137: #{tpu_custom_call.1} parent=135 // pred_check
          %p1861 = pneg %p467
        $region138: #{tpu_custom_call.1} parent=135 // pred_check_branch
          %1863 = sbr.rel (%p1861) target = $region140
        $region139: #{tpu_custom_call.1} parent=135 // pred_region
          %s1864 = sand.u32 %s452, 1
          %s1865 = scalar_lea.sflag [#allocation4], %s1864
          %s1866 = sand.u32 %s452, 1
          %s1867 = smul.addr %s1866, 8
          %s1868 = scalar_lea.vmem [#allocation17], %s1867
          %1869 = dma.done %s1865, 128
        $region140: #{tpu_custom_call.1} parent=135 // pred_fallthru
          _
      $region136: #{tpu_custom_call.1} parent=5 // pred_fallthru
        _
    $region6: #{tpu_custom_call.1} parent=1 // loop_footer
      %s38 = sadd.s32 1, %s34
    $region7: #{tpu_custom_call.1} parent=1 // loop_footer_branch
      %33 = sbr.rel target = $region3
    $region8: #{tpu_custom_call.1} parent=1 // loop_exit
      _
    %1870 = vsyncpa [#allocation3], 1
    %s1871 = scalar_lea.sflag [#allocation3], 1
    %1872 = vsyncpa %s1871, 1
    %1873 = vsyncpa [#allocation6], 1
    %1874 = vsyncpa [#allocation9], 1
    %1875 = vsyncpa [#allocation12], 1
    %1876 = vsyncpa [#allocation15], 1
    %1877 = vsyncpa [#allocation4], 1
    %s1878 = scalar_lea.sflag [#allocation4], 1
    %1879 = vsyncpa %s1878, 1

</llo_original>
